<compile_context>
chip_gen: v7x
topology: tpu7x:2x2x1
jax: 0.10.0
libtpu: 0.0.40
codegen_flags: <defaults>
</compile_context>

<pallas_src>
import jax
import jax.numpy as jnp
from jax.experimental import pallas as pl
from jax.experimental.pallas import tpu as pltpu


def _elu(x):
    # exp of the clamped argument avoids inf intermediates on the discarded branch.
    return jnp.where(x > 0.0, x, jnp.exp(jnp.minimum(x, 0.0)) - 1.0)


# ---------------------------------------------------------------------------
# Fused kernel: block-diag LSTM recurrence + imlp + merged MLP head.
# ---------------------------------------------------------------------------
def _make_fused_kernel(n_lstm, Htot, has_imlp, n_imlp, n_mlp_rest, feat_sizes):
    def kernel(*refs):
        out_ref = refs[-1]
        idx = 0
        feats = []

        # ----- fused LSTM branches -----
        if n_lstm > 0:
            whh_ref, bias_ref, h0_ref, c0_ref = refs[idx:idx + 4]
            idx += 4

            # Hoisted input projection for ALL timesteps into the fused gate
            # layout (gate-major [i|f|g|o], branch-major inside each gate).
            # One small matmul per branch (off the serial critical path).
            gx = None
            B = S = None
            for k in range(n_lstm):
                x_ref, wih_ref = refs[idx:idx + 2]
                idx += 2
                B, S, Ik = x_ref.shape
                part = jnp.dot(
                    x_ref[...].reshape(B * S, Ik).astype(jnp.bfloat16),
                    wih_ref[...],                       # (Ik, 4*Htot) bf16
                    preferred_element_type=jnp.float32)
                gx = part if gx is None else gx + part
            gx = (gx + bias_ref[...]).reshape(B, S, 4 * Htot)

            whh = whh_ref[...]                          # (Htot, 4*Htot) bf16
            h = jnp.broadcast_to(h0_ref[...], (B, Htot))
            c = jnp.broadcast_to(c0_ref[...], (B, Htot))

            # Serial recurrence, fully unrolled (S small & static).  One MXU push
            # + one sigmoid + two tanh per step; state kept in f32.
            for t in range(S):
                gates = gx[:, t, :] + jnp.dot(
                    h.astype(jnp.bfloat16), whh,
                    preferred_element_type=jnp.float32)   # (B, 4*Htot) f32
                sg = jax.nn.sigmoid(gates)                # one EUP pass
                th = jnp.tanh(gates)                      # one EUP pass
                i_g = sg[:, 0 * Htot:1 * Htot]
                f_g = sg[:, 1 * Htot:2 * Htot]
                g_g = th[:, 2 * Htot:3 * Htot]
                o_g = sg[:, 3 * Htot:4 * Htot]
                c = f_g * c + i_g * g_g
                h = o_g * jnp.tanh(c)
            # h == concat of per-branch last-step hidden states (branch order).
            feats.append(h)

        # ----- input MLP (Dropout = identity in eval) -----
        if has_imlp:
            hm = refs[idx][...]
            idx += 1
            for _ in range(n_imlp):
                w = refs[idx][...]
                b = refs[idx + 1][...]
                idx += 2
                hm = _elu(jnp.dot(hm, w, preferred_element_type=jnp.float32) + b)
            feats.append(hm)

        # ----- merged MLP head; torch.cat folded into segment-wise matmuls -----
        w1_ref = refs[idx]
        b1 = refs[idx + 1][...]
        idx += 2
        acc = b1
        off = 0
        for f, sz in zip(feats, feat_sizes):
            acc = acc + jnp.dot(f, w1_ref[off:off + sz, :],
                                preferred_element_type=jnp.float32)
            off += sz
        hmerged = _elu(acc)

        for l in range(n_mlp_rest):
            w = refs[idx][...]
            b = refs[idx + 1][...]
            idx += 2
            hmerged = jnp.dot(hmerged, w, preferred_element_type=jnp.float32) + b
            if l < n_mlp_rest - 1:            # ELU on mid layers, not on final LO
                hmerged = _elu(hmerged)

        out_ref[...] = hmerged.astype(out_ref.dtype)

    return kernel


# ---------------------------------------------------------------------------
# One-time parameter preparation (transpose / block-diag fusion / bf16 cast).
# ---------------------------------------------------------------------------
def prepare_params(lstm_params, imlp_w, imlp_b, mlp_w, mlp_b, has_imlp):
    n_lstm = len(lstm_params)
    hs = [p["whh"].shape[1] for p in lstm_params]     # whh is (4H, H) torch layout
    Htot = sum(hs)

    wih_list = []
    whh_fused = bias_fused = h0_fused = c0_fused = None
    if n_lstm > 0:
        whh_fused = jnp.zeros((Htot, 4 * Htot), jnp.float32)
        bias_fused = jnp.zeros((1, 4 * Htot), jnp.float32)
        h0_fused = jnp.zeros((1, Htot), jnp.float32)
        c0_fused = jnp.zeros((1, Htot), jnp.float32)
        off = 0
        for k, p in enumerate(lstm_params):
            H = hs[k]
            wihT = jnp.transpose(p["wih"])            # (I, 4H), cols [i f g o]
            whhT = jnp.transpose(p["whh"])            # (H, 4H), cols [i f g o]
            bias = p["bih"] + p["bhh"]                # (4H,)
            I = wihT.shape[0]
            wih_k = jnp.zeros((I, 4 * Htot), jnp.float32)
            for g in range(4):
                dst = slice(g * Htot + off, g * Htot + off + H)
                src = slice(g * H, (g + 1) * H)
                wih_k = wih_k.at[:, dst].set(wihT[:, src])
                whh_fused = whh_fused.at[off:off + H, dst].set(whhT[:, src])
                bias_fused = bias_fused.at[0, dst].set(bias[src])
            h0_fused = h0_fused.at[0, off:off + H].set(p["h0"].reshape(H))
            c0_fused = c0_fused.at[0, off:off + H].set(p["c0"].reshape(H))
            wih_list.append(wih_k.astype(jnp.bfloat16))
            off += H
        whh_fused = whh_fused.astype(jnp.bfloat16)

    imlp = [(w, b.reshape(1, -1)) for w, b in zip(imlp_w, imlp_b)] if has_imlp else []
    mlp = [(w, b.reshape(1, -1)) for w, b in zip(mlp_w, mlp_b)]

    feat_sizes = ([Htot] if n_lstm > 0 else [])
    if has_imlp:
        feat_sizes.append(imlp_w[-1].shape[1])
    assert sum(feat_sizes) == mlp_w[0].shape[0]

    return dict(n_lstm=n_lstm, Htot=Htot,
                wih=wih_list, whh=whh_fused, bias=bias_fused,
                h0=h0_fused, c0=c0_fused,
                has_imlp=has_imlp, imlp=imlp, mlp=mlp,
                feat_sizes=feat_sizes, out_dim=mlp_w[-1].shape[1])


# ---------------------------------------------------------------------------
# Wrapper: one pallas_call, everything resident in VMEM (footprint is tiny).
# ---------------------------------------------------------------------------
def lstms_forward(prepared, lstm_inputs, mlp_input):
    n_lstm = prepared["n_lstm"]
    Htot = prepared["Htot"]
    has_imlp = prepared["has_imlp"] and (mlp_input is not None)

    if n_lstm > 0:
        B = lstm_inputs[0].shape[0]
    else:
        B = mlp_input.shape[0]

    args = []
    if n_lstm > 0:
        args += [prepared["whh"], prepared["bias"], prepared["h0"], prepared["c0"]]
        for x, wih in zip(lstm_inputs, prepared["wih"]):
            args += [x, wih]
    if has_imlp:
        args.append(mlp_input)
        for w, b in prepared["imlp"]:
            args += [w, b]
    for w, b in prepared["mlp"]:
        args += [w, b]

    kernel = _make_fused_kernel(
        n_lstm=n_lstm, Htot=Htot, has_imlp=has_imlp,
        n_imlp=len(prepared["imlp"]), n_mlp_rest=len(prepared["mlp"]) - 1,
        feat_sizes=prepared["feat_sizes"])

    return pl.pallas_call(
        kernel,
        out_shape=jax.ShapeDtypeStruct((B, prepared["out_dim"]), jnp.float32),
        in_specs=[pl.BlockSpec(memory_space=pltpu.MemorySpace.VMEM)] * len(args),
        out_specs=pl.BlockSpec(memory_space=pltpu.MemorySpace.VMEM),
    )(*args)


if __name__ == "__main__":
    # ------------------ configuration (mirrors __init__ args) ------------------
    input_mask = [[True, True], True]
    input_sizes = [[4, 6], 8]          # [LSTM input sizes, MLP input size]
    hidden_sizes = [[32, 32], 32]
    num_layers = [[1, 1], 1]           # single-layer LSTMs
    merged_hidden_size = 32
    merged_num_mid_layers = 1
    output_size = 8
    batch_size = 2
    seq_len = 8
    gain = 1.2470202445983887

    key = jax.random.PRNGKey(0)
    keys = iter(jax.random.split(key, 64))

    # ------------------ deterministic parameter init ------------------
    lstm_params = []
    for i in range(len(input_sizes[0])):
        if not input_mask[0][i]:
            continue
        I = input_sizes[0][i]
        H = hidden_sizes[0][i]
        stdv = 1.0 / (H ** 0.5)
        wih = jax.random.uniform(next(keys), (4 * H, I), jnp.float32, -stdv, stdv)
        whh = jax.random.uniform(next(keys), (4 * H, H), jnp.float32, -stdv, stdv)
        bih = jax.random.uniform(next(keys), (4 * H,), jnp.float32, -stdv, stdv)
        bhh = jax.random.uniform(next(keys), (4 * H,), jnp.float32, -stdv, stdv)
        xav_std = gain * (2.0 / (H + H)) ** 0.5          # xavier_normal_ on (1,1,H)
        h0 = xav_std * jax.random.normal(next(keys), (1, 1, H), jnp.float32)
        c0 = xav_std * jax.random.normal(next(keys), (1, 1, H), jnp.float32)
        lstm_params.append(dict(wih=wih, whh=whh, bih=bih, bhh=bhh, h0=h0, c0=c0))

    def linear_init(kk, fan_in, fan_out):
        bound = 1.0 / (fan_in ** 0.5)
        k1, k2 = jax.random.split(kk)
        w = jax.random.uniform(k1, (fan_in, fan_out), jnp.float32, -bound, bound)
        b = jax.random.uniform(k2, (fan_out,), jnp.float32, -bound, bound)
        return w, b

    # imlp: Dropout -> Linear(in, H) -> ELU, then mid (Dropout -> Linear -> ELU)*
    has_imlp = input_mask[1] and input_sizes[1] > 0
    imlp_w, imlp_b = [], []
    w, b = linear_init(next(keys), input_sizes[1], hidden_sizes[1])
    imlp_w.append(w); imlp_b.append(b)
    for _ in range(merged_num_mid_layers):
        w, b = linear_init(next(keys), hidden_sizes[1], hidden_sizes[1])
        imlp_w.append(w); imlp_b.append(b)

    # merged mlp: Linear(cat, merged) -> ELU -> mids -> Linear(merged, out)
    cat_dim = sum(hidden_sizes[0][i] for i in range(len(hidden_sizes[0]))
                  if input_mask[0][i])
    cat_dim += hidden_sizes[1] if input_mask[1] else 0
    mlp_w, mlp_b = [], []
    w, b = linear_init(next(keys), cat_dim, merged_hidden_size)
    mlp_w.append(w); mlp_b.append(b)
    for _ in range(merged_num_mid_layers):
        w, b = linear_init(next(keys), merged_hidden_size, merged_hidden_size)
        mlp_w.append(w); mlp_b.append(b)
    w, b = linear_init(next(keys), merged_hidden_size, output_size)
    mlp_w.append(w); mlp_b.append(b)

    # ------------------ one-time parameter preparation ------------------
    prepared = prepare_params(lstm_params, imlp_w, imlp_b, mlp_w, mlp_b, has_imlp)

    # ------------------ deterministic example inputs ------------------
    x0 = jax.random.normal(next(keys), (batch_size, seq_len, input_sizes[0][0]),
                           jnp.float32)
    x1 = jax.random.normal(next(keys), (batch_size, seq_len, input_sizes[0][1]),
                           jnp.float32)
    xm = jax.random.normal(next(keys), (batch_size, input_sizes[1]), jnp.float32)

    # ------------------ run ------------------
    pred = lstms_forward(prepared, [x0, x1], xm)
    pred = jax.block_until_ready(pred)
    assert pred.shape == (batch_size, output_size)
    assert bool(jnp.all(jnp.isfinite(pred)))
    print("KERNEL_OK")
</pallas_src>

<mosaic_0001>
module attributes {stable_mosaic.version = 11 : i64} {
  func.func @kernel(%arg0: memref<64x256xbf16, #tpu.memory_space<vmem>>, %arg1: memref<1x256xf32, #tpu.memory_space<vmem>>, %arg2: memref<1x64xf32, #tpu.memory_space<vmem>>, %arg3: memref<1x64xf32, #tpu.memory_space<vmem>>, %arg4: memref<2x8x4xf32, #tpu.memory_space<vmem>>, %arg5: memref<4x256xbf16, #tpu.memory_space<vmem>>, %arg6: memref<2x8x6xf32, #tpu.memory_space<vmem>>, %arg7: memref<6x256xbf16, #tpu.memory_space<vmem>>, %arg8: memref<2x8xf32, #tpu.memory_space<vmem>>, %arg9: memref<8x32xf32, #tpu.memory_space<vmem>>, %arg10: memref<1x32xf32, #tpu.memory_space<vmem>>, %arg11: memref<32x32xf32, #tpu.memory_space<vmem>>, %arg12: memref<1x32xf32, #tpu.memory_space<vmem>>, %arg13: memref<96x32xf32, #tpu.memory_space<vmem>>, %arg14: memref<1x32xf32, #tpu.memory_space<vmem>>, %arg15: memref<32x32xf32, #tpu.memory_space<vmem>>, %arg16: memref<1x32xf32, #tpu.memory_space<vmem>>, %arg17: memref<32x8xf32, #tpu.memory_space<vmem>>, %arg18: memref<1x8xf32, #tpu.memory_space<vmem>>, %arg19: memref<2x8xf32, #tpu.memory_space<vmem>>) attributes {dimension_semantics = [], scalar_prefetch = 0 : i64, scratch_operands = 0 : i64, tpu.core_type = #tpu.core_type<tc>} {
    %c0 = arith.constant 0 : index
    %c0_0 = arith.constant 0 : index
    %c0_1 = arith.constant 0 : index
    %0 = vector.load %arg4[%c0, %c0_0, %c0_1] : memref<2x8x4xf32, #tpu.memory_space<vmem>>, vector<2x8x4xf32>
    %1 = vector.shape_cast %0 : vector<2x8x4xf32> to vector<16x4xf32>
    %2 = arith.truncf %1 : vector<16x4xf32> to vector<16x4xbf16>
    %c0_2 = arith.constant 0 : index
    %c0_3 = arith.constant 0 : index
    %3 = vector.load %arg5[%c0_2, %c0_3] : memref<4x256xbf16, #tpu.memory_space<vmem>>, vector<4x256xbf16>
    %cst = arith.constant dense<0.000000e+00> : vector<16x256xf32>
    %4 = tpu.matmul %2, %3, %cst {dimension_numbers = #tpu.dot_dimension_numbers<[1], [0], [0], [1], [0, 0, 1, 1], [], []>} : vector<16x4xbf16>, vector<4x256xbf16>, vector<16x256xf32> -> vector<16x256xf32>
    %c0_4 = arith.constant 0 : index
    %c0_5 = arith.constant 0 : index
    %c0_6 = arith.constant 0 : index
    %5 = vector.load %arg6[%c0_4, %c0_5, %c0_6] : memref<2x8x6xf32, #tpu.memory_space<vmem>>, vector<2x8x6xf32>
    %6 = vector.shape_cast %5 : vector<2x8x6xf32> to vector<16x6xf32>
    %7 = arith.truncf %6 : vector<16x6xf32> to vector<16x6xbf16>
    %c0_7 = arith.constant 0 : index
    %c0_8 = arith.constant 0 : index
    %8 = vector.load %arg7[%c0_7, %c0_8] : memref<6x256xbf16, #tpu.memory_space<vmem>>, vector<6x256xbf16>
    %cst_9 = arith.constant dense<0.000000e+00> : vector<16x256xf32>
    %9 = tpu.matmul %7, %8, %cst_9 {dimension_numbers = #tpu.dot_dimension_numbers<[1], [0], [0], [1], [0, 0, 1, 1], [], []>} : vector<16x6xbf16>, vector<6x256xbf16>, vector<16x256xf32> -> vector<16x256xf32>
    %10 = arith.addf %4, %9 : vector<16x256xf32>
    %c0_10 = arith.constant 0 : index
    %c0_11 = arith.constant 0 : index
    %11 = vector.load %arg1[%c0_10, %c0_11] : memref<1x256xf32, #tpu.memory_space<vmem>>, vector<1x256xf32>
    %12 = vector.broadcast %11 : vector<1x256xf32> to vector<16x256xf32>
    %13 = arith.addf %10, %12 : vector<16x256xf32>
    %14 = vector.shape_cast %13 : vector<16x256xf32> to vector<2x8x256xf32>
    %c0_12 = arith.constant 0 : index
    %c0_13 = arith.constant 0 : index
    %15 = vector.load %arg0[%c0_12, %c0_13] : memref<64x256xbf16, #tpu.memory_space<vmem>>, vector<64x256xbf16>
    %c0_14 = arith.constant 0 : index
    %c0_15 = arith.constant 0 : index
    %16 = vector.load %arg2[%c0_14, %c0_15] : memref<1x64xf32, #tpu.memory_space<vmem>>, vector<1x64xf32>
    %17 = vector.shape_cast %16 : vector<1x64xf32> to vector<1x64xf32>
    %18 = vector.broadcast %17 : vector<1x64xf32> to vector<2x64xf32>
    %c0_16 = arith.constant 0 : index
    %c0_17 = arith.constant 0 : index
    %19 = vector.load %arg3[%c0_16, %c0_17] : memref<1x64xf32, #tpu.memory_space<vmem>>, vector<1x64xf32>
    %20 = vector.shape_cast %19 : vector<1x64xf32> to vector<1x64xf32>
    %21 = vector.broadcast %20 : vector<1x64xf32> to vector<2x64xf32>
    %22 = vector.extract_strided_slice %14 {offsets = [0, 0, 0], sizes = [2, 1, 256], strides = [1, 1, 1]} : vector<2x8x256xf32> to vector<2x1x256xf32>
    %23 = vector.shape_cast %22 : vector<2x1x256xf32> to vector<2x256xf32>
    %24 = arith.truncf %18 : vector<2x64xf32> to vector<2x64xbf16>
    %cst_18 = arith.constant dense<0.000000e+00> : vector<2x256xf32>
    %25 = tpu.matmul %24, %15, %cst_18 {dimension_numbers = #tpu.dot_dimension_numbers<[1], [0], [0], [1], [0, 0, 1, 1], [], []>} : vector<2x64xbf16>, vector<64x256xbf16>, vector<2x256xf32> -> vector<2x256xf32>
    %26 = arith.addf %23, %25 : vector<2x256xf32>
    %27 = arith.negf %26 : vector<2x256xf32>
    %28 = math.exp %27 : vector<2x256xf32>
    %cst_19 = arith.constant 1.000000e+00 : f32
    %29 = vector.broadcast %cst_19 : f32 to vector<2x256xf32>
    %30 = arith.addf %29, %28 : vector<2x256xf32>
    %31 = arith.divf %29, %30 : vector<2x256xf32>
    %32 = math.tanh %26 : vector<2x256xf32>
    %33 = vector.extract_strided_slice %31 {offsets = [0, 0], sizes = [2, 64], strides = [1, 1]} : vector<2x256xf32> to vector<2x64xf32>
    %34 = vector.extract_strided_slice %31 {offsets = [0, 64], sizes = [2, 64], strides = [1, 1]} : vector<2x256xf32> to vector<2x64xf32>
    %35 = vector.extract_strided_slice %32 {offsets = [0, 128], sizes = [2, 64], strides = [1, 1]} : vector<2x256xf32> to vector<2x64xf32>
    %36 = vector.extract_strided_slice %31 {offsets = [0, 192], sizes = [2, 64], strides = [1, 1]} : vector<2x256xf32> to vector<2x64xf32>
    %37 = arith.mulf %34, %21 : vector<2x64xf32>
    %38 = arith.mulf %33, %35 : vector<2x64xf32>
    %39 = arith.addf %37, %38 : vector<2x64xf32>
    %40 = math.tanh %39 : vector<2x64xf32>
    %41 = arith.mulf %36, %40 : vector<2x64xf32>
    %42 = vector.extract_strided_slice %14 {offsets = [0, 1, 0], sizes = [2, 1, 256], strides = [1, 1, 1]} : vector<2x8x256xf32> to vector<2x1x256xf32>
    %43 = vector.shape_cast %42 : vector<2x1x256xf32> to vector<2x256xf32>
    %44 = arith.truncf %41 : vector<2x64xf32> to vector<2x64xbf16>
    %cst_20 = arith.constant dense<0.000000e+00> : vector<2x256xf32>
    %45 = tpu.matmul %44, %15, %cst_20 {dimension_numbers = #tpu.dot_dimension_numbers<[1], [0], [0], [1], [0, 0, 1, 1], [], []>} : vector<2x64xbf16>, vector<64x256xbf16>, vector<2x256xf32> -> vector<2x256xf32>
    %46 = arith.addf %43, %45 : vector<2x256xf32>
    %47 = arith.negf %46 : vector<2x256xf32>
    %48 = math.exp %47 : vector<2x256xf32>
    %cst_21 = arith.constant 1.000000e+00 : f32
    %49 = vector.broadcast %cst_21 : f32 to vector<2x256xf32>
    %50 = arith.addf %49, %48 : vector<2x256xf32>
    %51 = arith.divf %49, %50 : vector<2x256xf32>
    %52 = math.tanh %46 : vector<2x256xf32>
    %53 = vector.extract_strided_slice %51 {offsets = [0, 0], sizes = [2, 64], strides = [1, 1]} : vector<2x256xf32> to vector<2x64xf32>
    %54 = vector.extract_strided_slice %51 {offsets = [0, 64], sizes = [2, 64], strides = [1, 1]} : vector<2x256xf32> to vector<2x64xf32>
    %55 = vector.extract_strided_slice %52 {offsets = [0, 128], sizes = [2, 64], strides = [1, 1]} : vector<2x256xf32> to vector<2x64xf32>
    %56 = vector.extract_strided_slice %51 {offsets = [0, 192], sizes = [2, 64], strides = [1, 1]} : vector<2x256xf32> to vector<2x64xf32>
    %57 = arith.mulf %54, %39 : vector<2x64xf32>
    %58 = arith.mulf %53, %55 : vector<2x64xf32>
    %59 = arith.addf %57, %58 : vector<2x64xf32>
    %60 = math.tanh %59 : vector<2x64xf32>
    %61 = arith.mulf %56, %60 : vector<2x64xf32>
    %62 = vector.extract_strided_slice %14 {offsets = [0, 2, 0], sizes = [2, 1, 256], strides = [1, 1, 1]} : vector<2x8x256xf32> to vector<2x1x256xf32>
    %63 = vector.shape_cast %62 : vector<2x1x256xf32> to vector<2x256xf32>
    %64 = arith.truncf %61 : vector<2x64xf32> to vector<2x64xbf16>
    %cst_22 = arith.constant dense<0.000000e+00> : vector<2x256xf32>
    %65 = tpu.matmul %64, %15, %cst_22 {dimension_numbers = #tpu.dot_dimension_numbers<[1], [0], [0], [1], [0, 0, 1, 1], [], []>} : vector<2x64xbf16>, vector<64x256xbf16>, vector<2x256xf32> -> vector<2x256xf32>
    %66 = arith.addf %63, %65 : vector<2x256xf32>
    %67 = arith.negf %66 : vector<2x256xf32>
    %68 = math.exp %67 : vector<2x256xf32>
    %cst_23 = arith.constant 1.000000e+00 : f32
    %69 = vector.broadcast %cst_23 : f32 to vector<2x256xf32>
    %70 = arith.addf %69, %68 : vector<2x256xf32>
    %71 = arith.divf %69, %70 : vector<2x256xf32>
    %72 = math.tanh %66 : vector<2x256xf32>
    %73 = vector.extract_strided_slice %71 {offsets = [0, 0], sizes = [2, 64], strides = [1, 1]} : vector<2x256xf32> to vector<2x64xf32>
    %74 = vector.extract_strided_slice %71 {offsets = [0, 64], sizes = [2, 64], strides = [1, 1]} : vector<2x256xf32> to vector<2x64xf32>
    %75 = vector.extract_strided_slice %72 {offsets = [0, 128], sizes = [2, 64], strides = [1, 1]} : vector<2x256xf32> to vector<2x64xf32>
    %76 = vector.extract_strided_slice %71 {offsets = [0, 192], sizes = [2, 64], strides = [1, 1]} : vector<2x256xf32> to vector<2x64xf32>
    %77 = arith.mulf %74, %59 : vector<2x64xf32>
    %78 = arith.mulf %73, %75 : vector<2x64xf32>
    %79 = arith.addf %77, %78 : vector<2x64xf32>
    %80 = math.tanh %79 : vector<2x64xf32>
    %81 = arith.mulf %76, %80 : vector<2x64xf32>
    %82 = vector.extract_strided_slice %14 {offsets = [0, 3, 0], sizes = [2, 1, 256], strides = [1, 1, 1]} : vector<2x8x256xf32> to vector<2x1x256xf32>
    %83 = vector.shape_cast %82 : vector<2x1x256xf32> to vector<2x256xf32>
    %84 = arith.truncf %81 : vector<2x64xf32> to vector<2x64xbf16>
    %cst_24 = arith.constant dense<0.000000e+00> : vector<2x256xf32>
    %85 = tpu.matmul %84, %15, %cst_24 {dimension_numbers = #tpu.dot_dimension_numbers<[1], [0], [0], [1], [0, 0, 1, 1], [], []>} : vector<2x64xbf16>, vector<64x256xbf16>, vector<2x256xf32> -> vector<2x256xf32>
    %86 = arith.addf %83, %85 : vector<2x256xf32>
    %87 = arith.negf %86 : vector<2x256xf32>
    %88 = math.exp %87 : vector<2x256xf32>
    %cst_25 = arith.constant 1.000000e+00 : f32
    %89 = vector.broadcast %cst_25 : f32 to vector<2x256xf32>
    %90 = arith.addf %89, %88 : vector<2x256xf32>
    %91 = arith.divf %89, %90 : vector<2x256xf32>
    %92 = math.tanh %86 : vector<2x256xf32>
    %93 = vector.extract_strided_slice %91 {offsets = [0, 0], sizes = [2, 64], strides = [1, 1]} : vector<2x256xf32> to vector<2x64xf32>
    %94 = vector.extract_strided_slice %91 {offsets = [0, 64], sizes = [2, 64], strides = [1, 1]} : vector<2x256xf32> to vector<2x64xf32>
    %95 = vector.extract_strided_slice %92 {offsets = [0, 128], sizes = [2, 64], strides = [1, 1]} : vector<2x256xf32> to vector<2x64xf32>
    %96 = vector.extract_strided_slice %91 {offsets = [0, 192], sizes = [2, 64], strides = [1, 1]} : vector<2x256xf32> to vector<2x64xf32>
    %97 = arith.mulf %94, %79 : vector<2x64xf32>
    %98 = arith.mulf %93, %95 : vector<2x64xf32>
    %99 = arith.addf %97, %98 : vector<2x64xf32>
    %100 = math.tanh %99 : vector<2x64xf32>
    %101 = arith.mulf %96, %100 : vector<2x64xf32>
    %102 = vector.extract_strided_slice %14 {offsets = [0, 4, 0], sizes = [2, 1, 256], strides = [1, 1, 1]} : vector<2x8x256xf32> to vector<2x1x256xf32>
    %103 = vector.shape_cast %102 : vector<2x1x256xf32> to vector<2x256xf32>
    %104 = arith.truncf %101 : vector<2x64xf32> to vector<2x64xbf16>
    %cst_26 = arith.constant dense<0.000000e+00> : vector<2x256xf32>
    %105 = tpu.matmul %104, %15, %cst_26 {dimension_numbers = #tpu.dot_dimension_numbers<[1], [0], [0], [1], [0, 0, 1, 1], [], []>} : vector<2x64xbf16>, vector<64x256xbf16>, vector<2x256xf32> -> vector<2x256xf32>
    %106 = arith.addf %103, %105 : vector<2x256xf32>
    %107 = arith.negf %106 : vector<2x256xf32>
    %108 = math.exp %107 : vector<2x256xf32>
    %cst_27 = arith.constant 1.000000e+00 : f32
    %109 = vector.broadcast %cst_27 : f32 to vector<2x256xf32>
    %110 = arith.addf %109, %108 : vector<2x256xf32>
    %111 = arith.divf %109, %110 : vector<2x256xf32>
    %112 = math.tanh %106 : vector<2x256xf32>
    %113 = vector.extract_strided_slice %111 {offsets = [0, 0], sizes = [2, 64], strides = [1, 1]} : vector<2x256xf32> to vector<2x64xf32>
    %114 = vector.extract_strided_slice %111 {offsets = [0, 64], sizes = [2, 64], strides = [1, 1]} : vector<2x256xf32> to vector<2x64xf32>
    %115 = vector.extract_strided_slice %112 {offsets = [0, 128], sizes = [2, 64], strides = [1, 1]} : vector<2x256xf32> to vector<2x64xf32>
    %116 = vector.extract_strided_slice %111 {offsets = [0, 192], sizes = [2, 64], strides = [1, 1]} : vector<2x256xf32> to vector<2x64xf32>
    %117 = arith.mulf %114, %99 : vector<2x64xf32>
    %118 = arith.mulf %113, %115 : vector<2x64xf32>
    %119 = arith.addf %117, %118 : vector<2x64xf32>
    %120 = math.tanh %119 : vector<2x64xf32>
    %121 = arith.mulf %116, %120 : vector<2x64xf32>
    %122 = vector.extract_strided_slice %14 {offsets = [0, 5, 0], sizes = [2, 1, 256], strides = [1, 1, 1]} : vector<2x8x256xf32> to vector<2x1x256xf32>
    %123 = vector.shape_cast %122 : vector<2x1x256xf32> to vector<2x256xf32>
    %124 = arith.truncf %121 : vector<2x64xf32> to vector<2x64xbf16>
    %cst_28 = arith.constant dense<0.000000e+00> : vector<2x256xf32>
    %125 = tpu.matmul %124, %15, %cst_28 {dimension_numbers = #tpu.dot_dimension_numbers<[1], [0], [0], [1], [0, 0, 1, 1], [], []>} : vector<2x64xbf16>, vector<64x256xbf16>, vector<2x256xf32> -> vector<2x256xf32>
    %126 = arith.addf %123, %125 : vector<2x256xf32>
    %127 = arith.negf %126 : vector<2x256xf32>
    %128 = math.exp %127 : vector<2x256xf32>
    %cst_29 = arith.constant 1.000000e+00 : f32
    %129 = vector.broadcast %cst_29 : f32 to vector<2x256xf32>
    %130 = arith.addf %129, %128 : vector<2x256xf32>
    %131 = arith.divf %129, %130 : vector<2x256xf32>
    %132 = math.tanh %126 : vector<2x256xf32>
    %133 = vector.extract_strided_slice %131 {offsets = [0, 0], sizes = [2, 64], strides = [1, 1]} : vector<2x256xf32> to vector<2x64xf32>
    %134 = vector.extract_strided_slice %131 {offsets = [0, 64], sizes = [2, 64], strides = [1, 1]} : vector<2x256xf32> to vector<2x64xf32>
    %135 = vector.extract_strided_slice %132 {offsets = [0, 128], sizes = [2, 64], strides = [1, 1]} : vector<2x256xf32> to vector<2x64xf32>
    %136 = vector.extract_strided_slice %131 {offsets = [0, 192], sizes = [2, 64], strides = [1, 1]} : vector<2x256xf32> to vector<2x64xf32>
    %137 = arith.mulf %134, %119 : vector<2x64xf32>
    %138 = arith.mulf %133, %135 : vector<2x64xf32>
    %139 = arith.addf %137, %138 : vector<2x64xf32>
    %140 = math.tanh %139 : vector<2x64xf32>
    %141 = arith.mulf %136, %140 : vector<2x64xf32>
    %142 = vector.extract_strided_slice %14 {offsets = [0, 6, 0], sizes = [2, 1, 256], strides = [1, 1, 1]} : vector<2x8x256xf32> to vector<2x1x256xf32>
    %143 = vector.shape_cast %142 : vector<2x1x256xf32> to vector<2x256xf32>
    %144 = arith.truncf %141 : vector<2x64xf32> to vector<2x64xbf16>
    %cst_30 = arith.constant dense<0.000000e+00> : vector<2x256xf32>
    %145 = tpu.matmul %144, %15, %cst_30 {dimension_numbers = #tpu.dot_dimension_numbers<[1], [0], [0], [1], [0, 0, 1, 1], [], []>} : vector<2x64xbf16>, vector<64x256xbf16>, vector<2x256xf32> -> vector<2x256xf32>
    %146 = arith.addf %143, %145 : vector<2x256xf32>
    %147 = arith.negf %146 : vector<2x256xf32>
    %148 = math.exp %147 : vector<2x256xf32>
    %cst_31 = arith.constant 1.000000e+00 : f32
    %149 = vector.broadcast %cst_31 : f32 to vector<2x256xf32>
    %150 = arith.addf %149, %148 : vector<2x256xf32>
    %151 = arith.divf %149, %150 : vector<2x256xf32>
    %152 = math.tanh %146 : vector<2x256xf32>
    %153 = vector.extract_strided_slice %151 {offsets = [0, 0], sizes = [2, 64], strides = [1, 1]} : vector<2x256xf32> to vector<2x64xf32>
    %154 = vector.extract_strided_slice %151 {offsets = [0, 64], sizes = [2, 64], strides = [1, 1]} : vector<2x256xf32> to vector<2x64xf32>
    %155 = vector.extract_strided_slice %152 {offsets = [0, 128], sizes = [2, 64], strides = [1, 1]} : vector<2x256xf32> to vector<2x64xf32>
    %156 = vector.extract_strided_slice %151 {offsets = [0, 192], sizes = [2, 64], strides = [1, 1]} : vector<2x256xf32> to vector<2x64xf32>
    %157 = arith.mulf %154, %139 : vector<2x64xf32>
    %158 = arith.mulf %153, %155 : vector<2x64xf32>
    %159 = arith.addf %157, %158 : vector<2x64xf32>
    %160 = math.tanh %159 : vector<2x64xf32>
    %161 = arith.mulf %156, %160 : vector<2x64xf32>
    %162 = vector.extract_strided_slice %14 {offsets = [0, 7, 0], sizes = [2, 1, 256], strides = [1, 1, 1]} : vector<2x8x256xf32> to vector<2x1x256xf32>
    %163 = vector.shape_cast %162 : vector<2x1x256xf32> to vector<2x256xf32>
    %164 = arith.truncf %161 : vector<2x64xf32> to vector<2x64xbf16>
    %cst_32 = arith.constant dense<0.000000e+00> : vector<2x256xf32>
    %165 = tpu.matmul %164, %15, %cst_32 {dimension_numbers = #tpu.dot_dimension_numbers<[1], [0], [0], [1], [0, 0, 1, 1], [], []>} : vector<2x64xbf16>, vector<64x256xbf16>, vector<2x256xf32> -> vector<2x256xf32>
    %166 = arith.addf %163, %165 : vector<2x256xf32>
    %167 = arith.negf %166 : vector<2x256xf32>
    %168 = math.exp %167 : vector<2x256xf32>
    %cst_33 = arith.constant 1.000000e+00 : f32
    %169 = vector.broadcast %cst_33 : f32 to vector<2x256xf32>
    %170 = arith.addf %169, %168 : vector<2x256xf32>
    %171 = arith.divf %169, %170 : vector<2x256xf32>
    %172 = math.tanh %166 : vector<2x256xf32>
    %173 = vector.extract_strided_slice %171 {offsets = [0, 0], sizes = [2, 64], strides = [1, 1]} : vector<2x256xf32> to vector<2x64xf32>
    %174 = vector.extract_strided_slice %171 {offsets = [0, 64], sizes = [2, 64], strides = [1, 1]} : vector<2x256xf32> to vector<2x64xf32>
    %175 = vector.extract_strided_slice %172 {offsets = [0, 128], sizes = [2, 64], strides = [1, 1]} : vector<2x256xf32> to vector<2x64xf32>
    %176 = vector.extract_strided_slice %171 {offsets = [0, 192], sizes = [2, 64], strides = [1, 1]} : vector<2x256xf32> to vector<2x64xf32>
    %177 = arith.mulf %174, %159 : vector<2x64xf32>
    %178 = arith.mulf %173, %175 : vector<2x64xf32>
    %179 = arith.addf %177, %178 : vector<2x64xf32>
    %180 = math.tanh %179 : vector<2x64xf32>
    %181 = arith.mulf %176, %180 : vector<2x64xf32>
    %c0_34 = arith.constant 0 : index
    %c0_35 = arith.constant 0 : index
    %182 = vector.load %arg8[%c0_34, %c0_35] : memref<2x8xf32, #tpu.memory_space<vmem>>, vector<2x8xf32>
    %c0_36 = arith.constant 0 : index
    %c0_37 = arith.constant 0 : index
    %183 = vector.load %arg9[%c0_36, %c0_37] : memref<8x32xf32, #tpu.memory_space<vmem>>, vector<8x32xf32>
    %c0_38 = arith.constant 0 : index
    %c0_39 = arith.constant 0 : index
    %184 = vector.load %arg10[%c0_38, %c0_39] : memref<1x32xf32, #tpu.memory_space<vmem>>, vector<1x32xf32>
    %cst_40 = arith.constant dense<0.000000e+00> : vector<2x32xf32>
    %185 = tpu.matmul %182, %183, %cst_40 {dimension_numbers = #tpu.dot_dimension_numbers<[1], [0], [0], [1], [0, 0, 1, 1], [], []>} : vector<2x8xf32>, vector<8x32xf32>, vector<2x32xf32> -> vector<2x32xf32>
    %186 = vector.broadcast %184 : vector<1x32xf32> to vector<2x32xf32>
    %187 = arith.addf %185, %186 : vector<2x32xf32>
    %cst_41 = arith.constant 0.000000e+00 : f32
    %188 = vector.broadcast %cst_41 : f32 to vector<2x32xf32>
    %189 = arith.cmpf ogt, %187, %188 : vector<2x32xf32>
    %cst_42 = arith.constant 0.000000e+00 : f32
    %190 = vector.broadcast %cst_42 : f32 to vector<2x32xf32>
    %191 = arith.minimumf %187, %190 : vector<2x32xf32>
    %192 = math.exp %191 : vector<2x32xf32>
    %cst_43 = arith.constant 1.000000e+00 : f32
    %193 = vector.broadcast %cst_43 : f32 to vector<2x32xf32>
    %194 = arith.subf %192, %193 : vector<2x32xf32>
    %195 = arith.select %189, %187, %194 : vector<2x32xi1>, vector<2x32xf32>
    %c0_44 = arith.constant 0 : index
    %c0_45 = arith.constant 0 : index
    %196 = vector.load %arg11[%c0_44, %c0_45] : memref<32x32xf32, #tpu.memory_space<vmem>>, vector<32x32xf32>
    %c0_46 = arith.constant 0 : index
    %c0_47 = arith.constant 0 : index
    %197 = vector.load %arg12[%c0_46, %c0_47] : memref<1x32xf32, #tpu.memory_space<vmem>>, vector<1x32xf32>
    %cst_48 = arith.constant dense<0.000000e+00> : vector<2x32xf32>
    %198 = tpu.matmul %195, %196, %cst_48 {dimension_numbers = #tpu.dot_dimension_numbers<[1], [0], [0], [1], [0, 0, 1, 1], [], []>} : vector<2x32xf32>, vector<32x32xf32>, vector<2x32xf32> -> vector<2x32xf32>
    %199 = vector.broadcast %197 : vector<1x32xf32> to vector<2x32xf32>
    %200 = arith.addf %198, %199 : vector<2x32xf32>
    %cst_49 = arith.constant 0.000000e+00 : f32
    %201 = vector.broadcast %cst_49 : f32 to vector<2x32xf32>
    %202 = arith.cmpf ogt, %200, %201 : vector<2x32xf32>
    %cst_50 = arith.constant 0.000000e+00 : f32
    %203 = vector.broadcast %cst_50 : f32 to vector<2x32xf32>
    %204 = arith.minimumf %200, %203 : vector<2x32xf32>
    %205 = math.exp %204 : vector<2x32xf32>
    %cst_51 = arith.constant 1.000000e+00 : f32
    %206 = vector.broadcast %cst_51 : f32 to vector<2x32xf32>
    %207 = arith.subf %205, %206 : vector<2x32xf32>
    %208 = arith.select %202, %200, %207 : vector<2x32xi1>, vector<2x32xf32>
    %c0_52 = arith.constant 0 : index
    %c0_53 = arith.constant 0 : index
    %209 = vector.load %arg14[%c0_52, %c0_53] : memref<1x32xf32, #tpu.memory_space<vmem>>, vector<1x32xf32>
    %c0_54 = arith.constant 0 : index
    %c0_55 = arith.constant 0 : index
    %210 = vector.load %arg13[%c0_54, %c0_55] : memref<96x32xf32, #tpu.memory_space<vmem>>, vector<64x32xf32>
    %cst_56 = arith.constant dense<0.000000e+00> : vector<2x32xf32>
    %211 = tpu.matmul %181, %210, %cst_56 {dimension_numbers = #tpu.dot_dimension_numbers<[1], [0], [0], [1], [0, 0, 1, 1], [], []>} : vector<2x64xf32>, vector<64x32xf32>, vector<2x32xf32> -> vector<2x32xf32>
    %212 = vector.broadcast %209 : vector<1x32xf32> to vector<2x32xf32>
    %213 = arith.addf %212, %211 : vector<2x32xf32>
    %c64 = arith.constant 64 : index
    %c0_57 = arith.constant 0 : index
    %214 = vector.load %arg13[%c64, %c0_57] : memref<96x32xf32, #tpu.memory_space<vmem>>, vector<32x32xf32>
    %cst_58 = arith.constant dense<0.000000e+00> : vector<2x32xf32>
    %215 = tpu.matmul %208, %214, %cst_58 {dimension_numbers = #tpu.dot_dimension_numbers<[1], [0], [0], [1], [0, 0, 1, 1], [], []>} : vector<2x32xf32>, vector<32x32xf32>, vector<2x32xf32> -> vector<2x32xf32>
    %216 = arith.addf %213, %215 : vector<2x32xf32>
    %cst_59 = arith.constant 0.000000e+00 : f32
    %217 = vector.broadcast %cst_59 : f32 to vector<2x32xf32>
    %218 = arith.cmpf ogt, %216, %217 : vector<2x32xf32>
    %cst_60 = arith.constant 0.000000e+00 : f32
    %219 = vector.broadcast %cst_60 : f32 to vector<2x32xf32>
    %220 = arith.minimumf %216, %219 : vector<2x32xf32>
    %221 = math.exp %220 : vector<2x32xf32>
    %cst_61 = arith.constant 1.000000e+00 : f32
    %222 = vector.broadcast %cst_61 : f32 to vector<2x32xf32>
    %223 = arith.subf %221, %222 : vector<2x32xf32>
    %224 = arith.select %218, %216, %223 : vector<2x32xi1>, vector<2x32xf32>
    %c0_62 = arith.constant 0 : index
    %c0_63 = arith.constant 0 : index
    %225 = vector.load %arg15[%c0_62, %c0_63] : memref<32x32xf32, #tpu.memory_space<vmem>>, vector<32x32xf32>
    %c0_64 = arith.constant 0 : index
    %c0_65 = arith.constant 0 : index
    %226 = vector.load %arg16[%c0_64, %c0_65] : memref<1x32xf32, #tpu.memory_space<vmem>>, vector<1x32xf32>
    %cst_66 = arith.constant dense<0.000000e+00> : vector<2x32xf32>
    %227 = tpu.matmul %224, %225, %cst_66 {dimension_numbers = #tpu.dot_dimension_numbers<[1], [0], [0], [1], [0, 0, 1, 1], [], []>} : vector<2x32xf32>, vector<32x32xf32>, vector<2x32xf32> -> vector<2x32xf32>
    %228 = vector.broadcast %226 : vector<1x32xf32> to vector<2x32xf32>
    %229 = arith.addf %227, %228 : vector<2x32xf32>
    %cst_67 = arith.constant 0.000000e+00 : f32
    %230 = vector.broadcast %cst_67 : f32 to vector<2x32xf32>
    %231 = arith.cmpf ogt, %229, %230 : vector<2x32xf32>
    %cst_68 = arith.constant 0.000000e+00 : f32
    %232 = vector.broadcast %cst_68 : f32 to vector<2x32xf32>
    %233 = arith.minimumf %229, %232 : vector<2x32xf32>
    %234 = math.exp %233 : vector<2x32xf32>
    %cst_69 = arith.constant 1.000000e+00 : f32
    %235 = vector.broadcast %cst_69 : f32 to vector<2x32xf32>
    %236 = arith.subf %234, %235 : vector<2x32xf32>
    %237 = arith.select %231, %229, %236 : vector<2x32xi1>, vector<2x32xf32>
    %c0_70 = arith.constant 0 : index
    %c0_71 = arith.constant 0 : index
    %238 = vector.load %arg17[%c0_70, %c0_71] : memref<32x8xf32, #tpu.memory_space<vmem>>, vector<32x8xf32>
    %c0_72 = arith.constant 0 : index
    %c0_73 = arith.constant 0 : index
    %239 = vector.load %arg18[%c0_72, %c0_73] : memref<1x8xf32, #tpu.memory_space<vmem>>, vector<1x8xf32>
    %cst_74 = arith.constant dense<0.000000e+00> : vector<2x8xf32>
    %240 = tpu.matmul %237, %238, %cst_74 {dimension_numbers = #tpu.dot_dimension_numbers<[1], [0], [0], [1], [0, 0, 1, 1], [], []>} : vector<2x32xf32>, vector<32x8xf32>, vector<2x8xf32> -> vector<2x8xf32>
    %241 = vector.broadcast %239 : vector<1x8xf32> to vector<2x8xf32>
    %242 = arith.addf %240, %241 : vector<2x8xf32>
    %c0_75 = arith.constant 0 : index
    %c0_76 = arith.constant 0 : index
    %243 = vector.load %arg19[%c0_75, %c0_76] : memref<2x8xf32, #tpu.memory_space<vmem>>, vector<2x8xf32>
    tpu.vector_store %arg19[%c0_75, %c0_76], %242 {strides = array<i32>} : memref<2x8xf32, #tpu.memory_space<vmem>>, vector<2x8xf32>,
    return
  }
}

</mosaic_0001>

<llo_original>
// kernel: tpu_custom_call.1
$region0: #{tpu_custom_call.1}
  #allocation0 [shape = 'u32[]', space=smem, size = 0x4, offset = 0x4, fixed_abs, tag = 'smem constant byte address 0x4 - core index']
  #allocation1 [shape = 'u32[144,128]{1,0:T(1,128)}', space=vmem, size = 0x12000, scoped, tag = 'internal scratch']
  %s0 = inlined_call_operand.vmem [shape: bf16[64,256], index: 0, kind: input, shape index: {}]
  %s1 = inlined_call_operand.vmem [shape: f32[1,256], index: 1, kind: input, shape index: {}]
  %s2 = inlined_call_operand.vmem [shape: f32[1,64], index: 2, kind: input, shape index: {}]
  %s3 = inlined_call_operand.vmem [shape: f32[1,64], index: 3, kind: input, shape index: {}]
  %s4 = inlined_call_operand.vmem [shape: f32[2,8,4], index: 4, kind: input, shape index: {}]
  %s5 = inlined_call_operand.vmem [shape: bf16[4,256], index: 5, kind: input, shape index: {}]
  %s6 = inlined_call_operand.vmem [shape: f32[2,8,6], index: 6, kind: input, shape index: {}]
  %s7 = inlined_call_operand.vmem [shape: bf16[6,256], index: 7, kind: input, shape index: {}]
  %s8 = inlined_call_operand.vmem [shape: f32[2,8], index: 8, kind: input, shape index: {}]
  %s9 = inlined_call_operand.vmem [shape: f32[8,32], index: 9, kind: input, shape index: {}]
  %s10 = inlined_call_operand.vmem [shape: f32[1,32], index: 10, kind: input, shape index: {}]
  %s11 = inlined_call_operand.vmem [shape: f32[32,32], index: 11, kind: input, shape index: {}]
  %s12 = inlined_call_operand.vmem [shape: f32[1,32], index: 12, kind: input, shape index: {}]
  %s13 = inlined_call_operand.vmem [shape: f32[96,32], index: 13, kind: input, shape index: {}]
  %s14 = inlined_call_operand.vmem [shape: f32[1,32], index: 14, kind: input, shape index: {}]
  %s15 = inlined_call_operand.vmem [shape: f32[32,32], index: 15, kind: input, shape index: {}]
  %s16 = inlined_call_operand.vmem [shape: f32[1,32], index: 16, kind: input, shape index: {}]
  %s17 = inlined_call_operand.vmem [shape: f32[32,8], index: 17, kind: input, shape index: {}]
  %s18 = inlined_call_operand.vmem [shape: f32[1,8], index: 18, kind: input, shape index: {}]
  %s19 = inlined_call_operand.hbm [shape: f32[2,8], index: 19, kind: output, shape index: {}]
  %s20 = sld [smem:[#allocation0]]
  $region86: #{tpu_custom_call.1} parent=0
    _
  %s22 = ssub.s32 1, %s20
  %s23 = scalar_select 0, %s22, %s20
  $region1: #{tpu_custom_call.1} parent=0
    #allocation2 [shape = 'u8[1024]{0}', space=vmem, size = 0x400, scoped, tag = 'output window, operand 0, single buffered']
    #allocation3 [shape = 's32[1]{0}', space=sflag, size = 0x4, scoped, tag = 'scoped memory for tpu_custom_call.1']
    %24 = vsyncpa [#allocation3], 0
    // Predicated region
    $region2: #{tpu_custom_call.1} parent=1 // pred_check
      _
    $region3: #{tpu_custom_call.1} parent=1 // pred_check_branch
      %26 = sbr.rel (0) target = $region5
    $region4: #{tpu_custom_call.1} parent=1 // pred_region
      _
    $region5: #{tpu_custom_call.1} parent=1 // pred_fallthru
      _
    // Predicated region
    $region6: #{tpu_custom_call.1} parent=1 // pred_check
      _
    $region7: #{tpu_custom_call.1} parent=1 // pred_check_branch
      %28 = sbr.rel (0) target = $region9
    $region8: #{tpu_custom_call.1} parent=1 // pred_region
      _
    $region9: #{tpu_custom_call.1} parent=1 // pred_fallthru
      _
    // Predicated region
    $region10: #{tpu_custom_call.1} parent=1 // pred_check
      _
    $region11: #{tpu_custom_call.1} parent=1 // pred_check_branch
      %30 = sbr.rel (0) target = $region13
    $region12: #{tpu_custom_call.1} parent=1 // pred_region
      _
    $region13: #{tpu_custom_call.1} parent=1 // pred_fallthru
      _
    // Predicated region
    $region14: #{tpu_custom_call.1} parent=1 // pred_check
      _
    $region15: #{tpu_custom_call.1} parent=1 // pred_check_branch
      %32 = sbr.rel (0) target = $region17
    $region16: #{tpu_custom_call.1} parent=1 // pred_region
      _
    $region17: #{tpu_custom_call.1} parent=1 // pred_fallthru
      _
    // Predicated region
    $region18: #{tpu_custom_call.1} parent=1 // pred_check
      _
    $region19: #{tpu_custom_call.1} parent=1 // pred_check_branch
      %34 = sbr.rel (0) target = $region21
    $region20: #{tpu_custom_call.1} parent=1 // pred_region
      _
    $region21: #{tpu_custom_call.1} parent=1 // pred_fallthru
      _
    // Predicated region
    $region22: #{tpu_custom_call.1} parent=1 // pred_check
      _
    $region23: #{tpu_custom_call.1} parent=1 // pred_check_branch
      %36 = sbr.rel (0) target = $region25
    $region24: #{tpu_custom_call.1} parent=1 // pred_region
      _
    $region25: #{tpu_custom_call.1} parent=1 // pred_fallthru
      _
    // Predicated region
    $region26: #{tpu_custom_call.1} parent=1 // pred_check
      _
    $region27: #{tpu_custom_call.1} parent=1 // pred_check_branch
      %38 = sbr.rel (0) target = $region29
    $region28: #{tpu_custom_call.1} parent=1 // pred_region
      _
    $region29: #{tpu_custom_call.1} parent=1 // pred_fallthru
      _
    // Predicated region
    $region30: #{tpu_custom_call.1} parent=1 // pred_check
      _
    $region31: #{tpu_custom_call.1} parent=1 // pred_check_branch
      %40 = sbr.rel (0) target = $region33
    $region32: #{tpu_custom_call.1} parent=1 // pred_region
      _
    $region33: #{tpu_custom_call.1} parent=1 // pred_fallthru
      _
    // Predicated region
    $region34: #{tpu_custom_call.1} parent=1 // pred_check
      _
    $region35: #{tpu_custom_call.1} parent=1 // pred_check_branch
      %42 = sbr.rel (0) target = $region37
    $region36: #{tpu_custom_call.1} parent=1 // pred_region
      _
    $region37: #{tpu_custom_call.1} parent=1 // pred_fallthru
      _
    // Predicated region
    $region38: #{tpu_custom_call.1} parent=1 // pred_check
      _
    $region39: #{tpu_custom_call.1} parent=1 // pred_check_branch
      %44 = sbr.rel (0) target = $region41
    $region40: #{tpu_custom_call.1} parent=1 // pred_region
      _
    $region41: #{tpu_custom_call.1} parent=1 // pred_fallthru
      _
    // Predicated region
    $region42: #{tpu_custom_call.1} parent=1 // pred_check
      _
    $region43: #{tpu_custom_call.1} parent=1 // pred_check_branch
      %46 = sbr.rel (0) target = $region45
    $region44: #{tpu_custom_call.1} parent=1 // pred_region
      _
    $region45: #{tpu_custom_call.1} parent=1 // pred_fallthru
      _
    // Predicated region
    $region46: #{tpu_custom_call.1} parent=1 // pred_check
      _
    $region47: #{tpu_custom_call.1} parent=1 // pred_check_branch
      %48 = sbr.rel (0) target = $region49
    $region48: #{tpu_custom_call.1} parent=1 // pred_region
      _
    $region49: #{tpu_custom_call.1} parent=1 // pred_fallthru
      _
    // Predicated region
    $region50: #{tpu_custom_call.1} parent=1 // pred_check
      _
    $region51: #{tpu_custom_call.1} parent=1 // pred_check_branch
      %50 = sbr.rel (0) target = $region53
    $region52: #{tpu_custom_call.1} parent=1 // pred_region
      _
    $region53: #{tpu_custom_call.1} parent=1 // pred_fallthru
      _
    // Predicated region
    $region54: #{tpu_custom_call.1} parent=1 // pred_check
      _
    $region55: #{tpu_custom_call.1} parent=1 // pred_check_branch
      %52 = sbr.rel (0) target = $region57
    $region56: #{tpu_custom_call.1} parent=1 // pred_region
      _
    $region57: #{tpu_custom_call.1} parent=1 // pred_fallthru
      _
    // Predicated region
    $region58: #{tpu_custom_call.1} parent=1 // pred_check
      _
    $region59: #{tpu_custom_call.1} parent=1 // pred_check_branch
      %54 = sbr.rel (0) target = $region61
    $region60: #{tpu_custom_call.1} parent=1 // pred_region
      _
    $region61: #{tpu_custom_call.1} parent=1 // pred_fallthru
      _
    // Predicated region
    $region62: #{tpu_custom_call.1} parent=1 // pred_check
      _
    $region63: #{tpu_custom_call.1} parent=1 // pred_check_branch
      %56 = sbr.rel (0) target = $region65
    $region64: #{tpu_custom_call.1} parent=1 // pred_region
      _
    $region65: #{tpu_custom_call.1} parent=1 // pred_fallthru
      _
    // Predicated region
    $region66: #{tpu_custom_call.1} parent=1 // pred_check
      _
    $region67: #{tpu_custom_call.1} parent=1 // pred_check_branch
      %58 = sbr.rel (0) target = $region69
    $region68: #{tpu_custom_call.1} parent=1 // pred_region
      _
    $region69: #{tpu_custom_call.1} parent=1 // pred_fallthru
      _
    // Predicated region
    $region70: #{tpu_custom_call.1} parent=1 // pred_check
      _
    $region71: #{tpu_custom_call.1} parent=1 // pred_check_branch
      %60 = sbr.rel (0) target = $region73
    $region72: #{tpu_custom_call.1} parent=1 // pred_region
      _
    $region73: #{tpu_custom_call.1} parent=1 // pred_fallthru
      _
    // Predicated region
    $region74: #{tpu_custom_call.1} parent=1 // pred_check
      _
    $region75: #{tpu_custom_call.1} parent=1 // pred_check_branch
      %62 = sbr.rel (0) target = $region77
    $region76: #{tpu_custom_call.1} parent=1 // pred_region
      _
    $region77: #{tpu_custom_call.1} parent=1 // pred_fallthru
      _
    %v64 = vld [vmem:[%s4] sm:$0xff]
    %v65 = vld [vmem:[%s4 + $0x8] sm:$0xff]
    %v66 = vpack.c.bf16 %v65, %v64
    %v67 = vld [vmem:[%s5] sm:$0xf]
    %v68 = vld [vmem:[%s6] sm:$0xff]
    %v69 = vld [vmem:[%s6 + $0x8] sm:$0xff]
    %v70 = vpack.c.bf16 %v69, %v68
    %v71 = vld [vmem:[%s7] sm:$0x77]
    %v73 = vunpack.c.l.b16 %v71
    %v74 = vunpack.c.h.b16 %v71
    %v75 = vpack.c.b16 %v73, %v73
    %v76 = vpack.c.b16 %v74, %v74
    %vm77 = vcmask 48128
    %v79 = vsel %vm77, %v70, 0
    %vm81 = vcmask 1042432
    %v83 = vsel %vm81, %v75, 0
    %v86 = vsel %vm81, %v76, 0
    %88 = vmatprep.subr.bf16.mxu0 %v86
    %89 = vmatpush1.bf16.msra.mxu0 %v83
    %90 = vmatprep.subr.bf16.mxu0 0
    %91 = vmatpush1.bf16.msra.mxu0 0
    %92 = vmatprep.subr.bf16.mxu0 0
    %93 = vmatpush1.bf16.msra.mxu0 0
    %94 = vmatprep.subr.bf16.mxu0 0
    %95 = vmatpush1.bf16.msra.mxu0 0
    %96 = vmatprep.subr.bf16.mxu0 0
    %97 = vmatpush1.bf16.msra.mxu0 0
    %98 = vmatprep.subr.bf16.mxu0 0
    %99 = vmatpush1.bf16.msra.mxu0 0
    %100 = vmatprep.subr.bf16.mxu0 0
    %101 = vmatpush1.bf16.msra.mxu0 0
    %102 = vmatprep.subr.bf16.mxu0 0
    %103 = vmatpush1.bf16.msra.mxu0 0
    %104 = vmatprep.subr.bf16.mxu0 0
    %105 = vmatpush1.bf16.msra.mxu0 0
    %106 = vmatprep.subr.bf16.mxu0 0
    %107 = vmatpush1.bf16.msra.mxu0 0
    %108 = vmatprep.subr.bf16.mxu0 0
    %109 = vmatpush1.bf16.msra.mxu0 0
    %110 = vmatprep.subr.bf16.mxu0 0
    %111 = vmatpush1.bf16.msra.mxu0 0
    %112 = vmatprep.subr.bf16.mxu0 0
    %113 = vmatpush1.bf16.msra.mxu0 0
    %114 = vmatprep.subr.bf16.mxu0 0
    %115 = vmatpush1.bf16.msra.mxu0 0
    %116 = vmatprep.subr.bf16.mxu0 0
    %117 = vmatpush1.bf16.msra.mxu0 0
    %118 = vmatprep.subr.bf16.mxu0 0
    %119 = vmatpush1.bf16.msra.mxu0 0
    %120 = vmatprep.mubr.bf16.mxu0 0
    %121 = vmatmul.mubr.bf16.gmra.mrb[0].mxu0 %v79
    %v122 = vpop.f32.mrb[0].mxu0
    %v123 = vadd.f32 0.0, %v122
    %v124 = vpop.f32.mrb[0].mxu0
    %v125 = vadd.f32 0.0, %v124
    %v126 = vpop.f32.mrb[0].mxu0
    %v127 = vadd.f32 0.0, %v126
    %v128 = vpop.f32.mrb[0].mxu0
    %v129 = vadd.f32 0.0, %v128
    %130 = vdwg.mxu0
    %v133 = vunpack.c.l.s4 1983009808
    %v134 = vunpack.c.0.s8 %v133
    %v135 = vlaneseq
    %v136 = vshrl.u32 %v135, 7
    %v137 = vsub.s32 %v134, %v136
    %v138 = vrot.slane %v67, %v137
    %v139 = vcombine.high %v138, %v138
    %vm140 = vcmask 31744
    %v142 = vsel %vm140, %v66, 0
    %vm144 = vcmask 1041408
    %v146 = vsel %vm144, %v138, 0
    %v149 = vsel %vm144, %v139, 0
    %151 = vmatprep.subr.bf16.mxu0 %v149
    %152 = vmatpush1.bf16.msra.mxu0 %v146
    %153 = vmatprep.subr.bf16.mxu0 0
    %154 = vmatpush1.bf16.msra.mxu0 0
    %155 = vmatprep.subr.bf16.mxu0 0
    %156 = vmatpush1.bf16.msra.mxu0 0
    %157 = vmatprep.subr.bf16.mxu0 0
    %158 = vmatpush1.bf16.msra.mxu0 0
    %159 = vmatprep.subr.bf16.mxu0 0
    %160 = vmatpush1.bf16.msra.mxu0 0
    %161 = vmatprep.subr.bf16.mxu0 0
    %162 = vmatpush1.bf16.msra.mxu0 0
    %163 = vmatprep.subr.bf16.mxu0 0
    %164 = vmatpush1.bf16.msra.mxu0 0
    %165 = vmatprep.subr.bf16.mxu0 0
    %166 = vmatpush1.bf16.msra.mxu0 0
    %167 = vmatprep.subr.bf16.mxu0 0
    %168 = vmatpush1.bf16.msra.mxu0 0
    %169 = vmatprep.subr.bf16.mxu0 0
    %170 = vmatpush1.bf16.msra.mxu0 0
    %171 = vmatprep.subr.bf16.mxu0 0
    %172 = vmatpush1.bf16.msra.mxu0 0
    %173 = vmatprep.subr.bf16.mxu0 0
    %174 = vmatpush1.bf16.msra.mxu0 0
    %175 = vmatprep.subr.bf16.mxu0 0
    %176 = vmatpush1.bf16.msra.mxu0 0
    %177 = vmatprep.subr.bf16.mxu0 0
    %178 = vmatpush1.bf16.msra.mxu0 0
    %179 = vmatprep.subr.bf16.mxu0 0
    %180 = vmatpush1.bf16.msra.mxu0 0
    %181 = vmatprep.subr.bf16.mxu0 0
    %182 = vmatpush1.bf16.msra.mxu0 0
    %183 = vmatprep.mubr.bf16.mxu0 0
    %184 = vmatmul.mubr.bf16.gmra.mrb[0].mxu0 %v142
    %v185 = vpop.f32.mrb[0].mxu0
    %v186 = vadd.f32 %v123, %v185
    %v187 = vpop.f32.mrb[0].mxu0
    %v188 = vadd.f32 %v125, %v187
    %v189 = vpop.f32.mrb[0].mxu0
    %v190 = vadd.f32 %v127, %v189
    %v191 = vpop.f32.mrb[0].mxu0
    %v192 = vadd.f32 %v129, %v191
    %193 = vdwg.mxu0
    %v194 = vld [vmem:[%s1] sm:$0x3]
    %v196 = vlaneseq
    %v197 = vshrl.u32 %v196, 7
    %v198 = vsub.s32 0, %v197
    %v199 = vrot.slane %v194, %v198
    %v200 = vlaneseq
    %v201 = vshrl.u32 %v200, 7
    %v202 = vsub.s32 1, %v201
    %v203 = vrot.slane %v194, %v202
    %v206 = vadd.f32 %v186, %v199
    %v207 = vadd.f32 %v188, %v203
    %v208 = vadd.f32 %v190, %v199
    %v209 = vadd.f32 %v192, %v203
    %v210 = vld [vmem:[%s0] sm:$0xff]
    %v211 = vld [vmem:[%s0 + $0x8] sm:$0xff]
    %v212 = vld [vmem:[%s0 + $0x10] sm:$0xff]
    %v213 = vld [vmem:[%s0 + $0x18] sm:$0xff]
    %v214 = vld [vmem:[%s0 + $0x20] sm:$0xff]
    %v215 = vld [vmem:[%s0 + $0x28] sm:$0xff]
    %v216 = vld [vmem:[%s0 + $0x30] sm:$0xff]
    %v217 = vld [vmem:[%s0 + $0x38] sm:$0xff]
    %v218 = vld [vmem:[%s2] sm:$0x1]
    %v220 = vlaneseq
    %v221 = vshrl.u32 %v220, 7
    %v222 = vsub.s32 0, %v221
    %v223 = vrot.slane %v218, %v222
    %v225 = vld [vmem:[%s3] sm:$0x1]
    %v227 = vlaneseq
    %v228 = vshrl.u32 %v227, 7
    %v229 = vsub.s32 0, %v228
    %v230 = vrot.slane %v225, %v229
    %v231 = vpack.c.bf16 %v223, %v223
    %v240 = vunpack.c.l.b16 %v210
    %v241 = vunpack.c.h.b16 %v210
    %v242 = vunpack.c.l.b16 %v211
    %v243 = vunpack.c.h.b16 %v211
    %v244 = vunpack.c.l.b16 %v212
    %v245 = vunpack.c.h.b16 %v212
    %v246 = vunpack.c.l.b16 %v213
    %v247 = vunpack.c.h.b16 %v213
    %v248 = vunpack.c.l.b16 %v214
    %v249 = vunpack.c.h.b16 %v214
    %v250 = vunpack.c.l.b16 %v215
    %v251 = vunpack.c.h.b16 %v215
    %v252 = vunpack.c.l.b16 %v216
    %v253 = vunpack.c.h.b16 %v216
    %v254 = vunpack.c.l.b16 %v217
    %v255 = vunpack.c.h.b16 %v217
    %v256 = vpack.c.b16 %v242, %v240
    %v257 = vpack.c.b16 %v243, %v241
    %v258 = vpack.c.b16 %v246, %v244
    %v259 = vpack.c.b16 %v247, %v245
    %v260 = vpack.c.b16 %v250, %v248
    %v261 = vpack.c.b16 %v251, %v249
    %v262 = vpack.c.b16 %v254, %v252
    %v263 = vpack.c.b16 %v255, %v253
    %vm272 = vcmask 523264
    %v274 = vsel %vm272, %v231, 0
    %276 = vmatprep.subr.bf16.mxu0 %v257
    %277 = vmatpush1.bf16.msra.mxu0 %v256
    %278 = vmatprep.subr.bf16.mxu0 %v259
    %279 = vmatpush1.bf16.msra.mxu0 %v258
    %280 = vmatprep.subr.bf16.mxu0 %v261
    %281 = vmatpush1.bf16.msra.mxu0 %v260
    %282 = vmatprep.subr.bf16.mxu0 %v263
    %283 = vmatpush1.bf16.msra.mxu0 %v262
    %284 = vmatprep.subr.bf16.mxu0 0
    %285 = vmatpush1.bf16.msra.mxu0 0
    %286 = vmatprep.subr.bf16.mxu0 0
    %287 = vmatpush1.bf16.msra.mxu0 0
    %288 = vmatprep.subr.bf16.mxu0 0
    %289 = vmatpush1.bf16.msra.mxu0 0
    %290 = vmatprep.subr.bf16.mxu0 0
    %291 = vmatpush1.bf16.msra.mxu0 0
    %292 = vmatprep.subr.bf16.mxu0 0
    %293 = vmatpush1.bf16.msra.mxu0 0
    %294 = vmatprep.subr.bf16.mxu0 0
    %295 = vmatpush1.bf16.msra.mxu0 0
    %296 = vmatprep.subr.bf16.mxu0 0
    %297 = vmatpush1.bf16.msra.mxu0 0
    %298 = vmatprep.subr.bf16.mxu0 0
    %299 = vmatpush1.bf16.msra.mxu0 0
    %300 = vmatprep.subr.bf16.mxu0 0
    %301 = vmatpush1.bf16.msra.mxu0 0
    %302 = vmatprep.subr.bf16.mxu0 0
    %303 = vmatpush1.bf16.msra.mxu0 0
    %304 = vmatprep.subr.bf16.mxu0 0
    %305 = vmatpush1.bf16.msra.mxu0 0
    %306 = vmatprep.subr.bf16.mxu0 0
    %307 = vmatpush1.bf16.msra.mxu0 0
    %308 = vmatprep.mubr.bf16.mxu0 0
    %309 = vmatmul.mubr.bf16.gmra.mrb[0].mxu0 %v274
    %v310 = vpop.f32.mrb[0].mxu0
    %v311 = vadd.f32 0.0, %v310
    %v312 = vpop.f32.mrb[0].mxu0
    %v313 = vadd.f32 0.0, %v312
    %v314 = vpop.f32.mrb[0].mxu0
    %v315 = vpop.f32.mrb[0].mxu0
    %316 = vdwg.mxu0
    %v319 = vrot.slane %v311, 1
    %v320 = vrot.slane %v313, 1
    %v325 = vadd.f32 %v206, %v311
    %v326 = vadd.f32 %v207, %v313
    %v327 = vadd.f32 %v208, %v319
    %v328 = vadd.f32 %v209, %v320
    %v329 = vxor.u32 %v325, 2147483648
    %v330 = vxor.u32 %v326, 2147483648
    %v331 = vxor.u32 %v327, 2147483648
    %v332 = vxor.u32 %v328, 2147483648
    %v333 = vmul.f32 %v329, 1.442695
    %v334 = vpow.pop %v333
    %v335 = vmul.f32 %v330, 1.442695
    %v336 = vpow.pop %v335
    %v337 = vmul.f32 %v331, 1.442695
    %v338 = vpow.pop %v337
    %v339 = vmul.f32 %v332, 1.442695
    %v340 = vpow.pop %v339
    %v341 = vadd.f32 %v334, 1.0
    %v342 = vadd.f32 %v336, 1.0
    %v343 = vadd.f32 %v338, 1.0
    %v344 = vadd.f32 %v340, 1.0
    %v345 = vrcp.pop %v341
    %v346 = vmul.f32 1.0, %v345
    %v347 = vrcp.pop %v342
    %v348 = vmul.f32 1.0, %v347
    %v349 = vrcp.pop %v343
    %v350 = vmul.f32 1.0, %v349
    %v351 = vrcp.pop %v344
    %v352 = vmul.f32 1.0, %v351
    %v353 = vtanh.pop %v326
    %v354 = vtanh.pop %v328
    %355 = vrot.lane.b32.xlu0 %v230, 64
    %v356 = vpop.permute.xlu0 %355
    %v358 = vmul.f32 %v346, %v356
    %v359 = vmul.f32 %v350, %v356
    %v360 = vmul.f32 %v346, %v353
    %v361 = vmul.f32 %v350, %v354
    %364 = vrot.lane.b32.xlu0 %v360, 64
    %v365 = vpop.permute.xlu0 %364
    %366 = vrot.lane.b32.xlu0 %v361, 64
    %v367 = vpop.permute.xlu0 %366
    %v370 = vadd.f32 %v358, %v365
    %v371 = vadd.f32 %v359, %v367
    %v372 = vtanh.pop %v370
    %v373 = vtanh.pop %v371
    %v374 = vmul.f32 %v348, %v372
    %v375 = vmul.f32 %v352, %v373
    %v376 = vpack.c.bf16 %v374, %v374
    %v377 = vpack.c.bf16 %v375, %v375
    %v380 = vunpack.c.l.b16 %v376
    %v381 = vunpack.c.l.b16 %v377
    %v382 = vrot.slane %v381, 7
    %vm383 = vcmask 1041409
    %v384 = vsel %vm383, %v382, %v380
    %v385 = vpack.c.b16 %v384, %v384
    %386 = vrot.lane.b32.xlu0 %v385, 64
    %v387 = vpop.permute.xlu0 %386
    %v389 = vsel %vm272, %v387, 0
    %391 = vmatprep.subr.bf16.mxu0 %v257
    %392 = vmatpush1.bf16.msra.mxu0 %v256
    %393 = vmatprep.subr.bf16.mxu0 %v259
    %394 = vmatpush1.bf16.msra.mxu0 %v258
    %395 = vmatprep.subr.bf16.mxu0 %v261
    %396 = vmatpush1.bf16.msra.mxu0 %v260
    %397 = vmatprep.subr.bf16.mxu0 %v263
    %398 = vmatpush1.bf16.msra.mxu0 %v262
    %399 = vmatprep.subr.bf16.mxu0 0
    %400 = vmatpush1.bf16.msra.mxu0 0
    %401 = vmatprep.subr.bf16.mxu0 0
    %402 = vmatpush1.bf16.msra.mxu0 0
    %403 = vmatprep.subr.bf16.mxu0 0
    %404 = vmatpush1.bf16.msra.mxu0 0
    %405 = vmatprep.subr.bf16.mxu0 0
    %406 = vmatpush1.bf16.msra.mxu0 0
    %407 = vmatprep.subr.bf16.mxu0 0
    %408 = vmatpush1.bf16.msra.mxu0 0
    %409 = vmatprep.subr.bf16.mxu0 0
    %410 = vmatpush1.bf16.msra.mxu0 0
    %411 = vmatprep.subr.bf16.mxu0 0
    %412 = vmatpush1.bf16.msra.mxu0 0
    %413 = vmatprep.subr.bf16.mxu0 0
    %414 = vmatpush1.bf16.msra.mxu0 0
    %415 = vmatprep.subr.bf16.mxu0 0
    %416 = vmatpush1.bf16.msra.mxu0 0
    %417 = vmatprep.subr.bf16.mxu0 0
    %418 = vmatpush1.bf16.msra.mxu0 0
    %419 = vmatprep.subr.bf16.mxu0 0
    %420 = vmatpush1.bf16.msra.mxu0 0
    %421 = vmatprep.subr.bf16.mxu0 0
    %422 = vmatpush1.bf16.msra.mxu0 0
    %423 = vmatprep.mubr.bf16.mxu0 0
    %424 = vmatmul.mubr.bf16.gmra.mrb[0].mxu0 %v389
    %v425 = vpop.f32.mrb[0].mxu0
    %v426 = vadd.f32 0.0, %v425
    %v427 = vpop.f32.mrb[0].mxu0
    %v428 = vadd.f32 0.0, %v427
    %v429 = vpop.f32.mrb[0].mxu0
    %v430 = vpop.f32.mrb[0].mxu0
    %431 = vdwg.mxu0
    %v434 = vrot.slane %v426, 7
    %v435 = vrot.slane %v428, 7
    %v440 = vadd.f32 %v206, %v434
    %v441 = vadd.f32 %v207, %v435
    %v442 = vadd.f32 %v208, %v426
    %v443 = vadd.f32 %v209, %v428
    %v444 = vxor.u32 %v440, 2147483648
    %v445 = vxor.u32 %v441, 2147483648
    %v446 = vxor.u32 %v442, 2147483648
    %v447 = vxor.u32 %v443, 2147483648
    %v448 = vmul.f32 %v444, 1.442695
    %v449 = vpow.pop %v448
    %v450 = vmul.f32 %v445, 1.442695
    %v451 = vpow.pop %v450
    %v452 = vmul.f32 %v446, 1.442695
    %v453 = vpow.pop %v452
    %v454 = vmul.f32 %v447, 1.442695
    %v455 = vpow.pop %v454
    %v456 = vadd.f32 %v449, 1.0
    %v457 = vadd.f32 %v451, 1.0
    %v458 = vadd.f32 %v453, 1.0
    %v459 = vadd.f32 %v455, 1.0
    %v460 = vrcp.pop %v456
    %v461 = vmul.f32 1.0, %v460
    %v462 = vrcp.pop %v457
    %v463 = vmul.f32 1.0, %v462
    %v464 = vrcp.pop %v458
    %v465 = vmul.f32 1.0, %v464
    %v466 = vrcp.pop %v459
    %v467 = vmul.f32 1.0, %v466
    %v468 = vtanh.pop %v441
    %v469 = vtanh.pop %v443
    %v472 = vrot.slane %v370, 7
    %v473 = vrot.slane %v371, 7
    %v476 = vmul.f32 %v461, %v472
    %v477 = vmul.f32 %v465, %v473
    %v478 = vmul.f32 %v461, %v468
    %v479 = vmul.f32 %v465, %v469
    %482 = vrot.lane.b32.xlu0 %v478, 64
    %v483 = vpop.permute.xlu0 %482
    %484 = vrot.lane.b32.xlu0 %v479, 64
    %v485 = vpop.permute.xlu0 %484
    %v488 = vadd.f32 %v476, %v483
    %v489 = vadd.f32 %v477, %v485
    %v490 = vtanh.pop %v488
    %v491 = vtanh.pop %v489
    %v492 = vmul.f32 %v463, %v490
    %v493 = vmul.f32 %v467, %v491
    %v494 = vpack.c.bf16 %v492, %v492
    %v495 = vpack.c.bf16 %v493, %v493
    %v498 = vunpack.c.l.b16 %v494
    %v499 = vunpack.c.l.b16 %v495
    %v500 = vrot.slane %v498, 1
    %v501 = vsel %vm383, %v499, %v500
    %v502 = vpack.c.b16 %v501, %v501
    %503 = vrot.lane.b32.xlu0 %v502, 64
    %v504 = vpop.permute.xlu0 %503
    %v506 = vsel %vm272, %v504, 0
    %508 = vmatprep.subr.bf16.mxu0 %v257
    %509 = vmatpush1.bf16.msra.mxu0 %v256
    %510 = vmatprep.subr.bf16.mxu0 %v259
    %511 = vmatpush1.bf16.msra.mxu0 %v258
    %512 = vmatprep.subr.bf16.mxu0 %v261
    %513 = vmatpush1.bf16.msra.mxu0 %v260
    %514 = vmatprep.subr.bf16.mxu0 %v263
    %515 = vmatpush1.bf16.msra.mxu0 %v262
    %516 = vmatprep.subr.bf16.mxu0 0
    %517 = vmatpush1.bf16.msra.mxu0 0
    %518 = vmatprep.subr.bf16.mxu0 0
    %519 = vmatpush1.bf16.msra.mxu0 0
    %520 = vmatprep.subr.bf16.mxu0 0
    %521 = vmatpush1.bf16.msra.mxu0 0
    %522 = vmatprep.subr.bf16.mxu0 0
    %523 = vmatpush1.bf16.msra.mxu0 0
    %524 = vmatprep.subr.bf16.mxu0 0
    %525 = vmatpush1.bf16.msra.mxu0 0
    %526 = vmatprep.subr.bf16.mxu0 0
    %527 = vmatpush1.bf16.msra.mxu0 0
    %528 = vmatprep.subr.bf16.mxu0 0
    %529 = vmatpush1.bf16.msra.mxu0 0
    %530 = vmatprep.subr.bf16.mxu0 0
    %531 = vmatpush1.bf16.msra.mxu0 0
    %532 = vmatprep.subr.bf16.mxu0 0
    %533 = vmatpush1.bf16.msra.mxu0 0
    %534 = vmatprep.subr.bf16.mxu0 0
    %535 = vmatpush1.bf16.msra.mxu0 0
    %536 = vmatprep.subr.bf16.mxu0 0
    %537 = vmatpush1.bf16.msra.mxu0 0
    %538 = vmatprep.subr.bf16.mxu0 0
    %539 = vmatpush1.bf16.msra.mxu0 0
    %540 = vmatprep.mubr.bf16.mxu0 0
    %541 = vmatmul.mubr.bf16.gmra.mrb[0].mxu0 %v506
    %v542 = vpop.f32.mrb[0].mxu0
    %v543 = vadd.f32 0.0, %v542
    %v544 = vpop.f32.mrb[0].mxu0
    %v545 = vadd.f32 0.0, %v544
    %v546 = vpop.f32.mrb[0].mxu0
    %v547 = vpop.f32.mrb[0].mxu0
    %548 = vdwg.mxu0
    %v551 = vrot.slane %v543, 6
    %v552 = vrot.slane %v545, 6
    %v553 = vrot.slane %v543, 7
    %v554 = vrot.slane %v545, 7
    %v559 = vadd.f32 %v206, %v551
    %v560 = vadd.f32 %v207, %v552
    %v561 = vadd.f32 %v208, %v553
    %v562 = vadd.f32 %v209, %v554
    %v563 = vxor.u32 %v559, 2147483648
    %v564 = vxor.u32 %v560, 2147483648
    %v565 = vxor.u32 %v561, 2147483648
    %v566 = vxor.u32 %v562, 2147483648
    %v567 = vmul.f32 %v563, 1.442695
    %v568 = vpow.pop %v567
    %v569 = vmul.f32 %v564, 1.442695
    %v570 = vpow.pop %v569
    %v571 = vmul.f32 %v565, 1.442695
    %v572 = vpow.pop %v571
    %v573 = vmul.f32 %v566, 1.442695
    %v574 = vpow.pop %v573
    %v575 = vadd.f32 %v568, 1.0
    %v576 = vadd.f32 %v570, 1.0
    %v577 = vadd.f32 %v572, 1.0
    %v578 = vadd.f32 %v574, 1.0
    %v579 = vrcp.pop %v575
    %v580 = vmul.f32 1.0, %v579
    %v581 = vrcp.pop %v576
    %v582 = vmul.f32 1.0, %v581
    %v583 = vrcp.pop %v577
    %v584 = vmul.f32 1.0, %v583
    %v585 = vrcp.pop %v578
    %v586 = vmul.f32 1.0, %v585
    %v587 = vtanh.pop %v560
    %v588 = vtanh.pop %v562
    %v591 = vrot.slane %v488, 7
    %v592 = vrot.slane %v489, 7
    %v595 = vmul.f32 %v580, %v591
    %v596 = vmul.f32 %v584, %v592
    %v597 = vmul.f32 %v580, %v587
    %v598 = vmul.f32 %v584, %v588
    %601 = vrot.lane.b32.xlu0 %v597, 64
    %v602 = vpop.permute.xlu0 %601
    %603 = vrot.lane.b32.xlu0 %v598, 64
    %v604 = vpop.permute.xlu0 %603
    %v607 = vadd.f32 %v595, %v602
    %v608 = vadd.f32 %v596, %v604
    %v609 = vtanh.pop %v607
    %v610 = vtanh.pop %v608
    %v611 = vmul.f32 %v582, %v609
    %v612 = vmul.f32 %v586, %v610
    %v613 = vpack.c.bf16 %v611, %v611
    %v614 = vpack.c.bf16 %v612, %v612
    %v617 = vunpack.c.l.b16 %v613
    %v618 = vunpack.c.l.b16 %v614
    %v619 = vrot.slane %v617, 2
    %v620 = vrot.slane %v618, 1
    %v621 = vsel %vm383, %v620, %v619
    %v622 = vpack.c.b16 %v621, %v621
    %623 = vrot.lane.b32.xlu0 %v622, 64
    %v624 = vpop.permute.xlu0 %623
    %v626 = vsel %vm272, %v624, 0
    %628 = vmatprep.subr.bf16.mxu0 %v257
    %629 = vmatpush1.bf16.msra.mxu0 %v256
    %630 = vmatprep.subr.bf16.mxu0 %v259
    %631 = vmatpush1.bf16.msra.mxu0 %v258
    %632 = vmatprep.subr.bf16.mxu0 %v261
    %633 = vmatpush1.bf16.msra.mxu0 %v260
    %634 = vmatprep.subr.bf16.mxu0 %v263
    %635 = vmatpush1.bf16.msra.mxu0 %v262
    %636 = vmatprep.subr.bf16.mxu0 0
    %637 = vmatpush1.bf16.msra.mxu0 0
    %638 = vmatprep.subr.bf16.mxu0 0
    %639 = vmatpush1.bf16.msra.mxu0 0
    %640 = vmatprep.subr.bf16.mxu0 0
    %641 = vmatpush1.bf16.msra.mxu0 0
    %642 = vmatprep.subr.bf16.mxu0 0
    %643 = vmatpush1.bf16.msra.mxu0 0
    %644 = vmatprep.subr.bf16.mxu0 0
    %645 = vmatpush1.bf16.msra.mxu0 0
    %646 = vmatprep.subr.bf16.mxu0 0
    %647 = vmatpush1.bf16.msra.mxu0 0
    %648 = vmatprep.subr.bf16.mxu0 0
    %649 = vmatpush1.bf16.msra.mxu0 0
    %650 = vmatprep.subr.bf16.mxu0 0
    %651 = vmatpush1.bf16.msra.mxu0 0
    %652 = vmatprep.subr.bf16.mxu0 0
    %653 = vmatpush1.bf16.msra.mxu0 0
    %654 = vmatprep.subr.bf16.mxu0 0
    %655 = vmatpush1.bf16.msra.mxu0 0
    %656 = vmatprep.subr.bf16.mxu0 0
    %657 = vmatpush1.bf16.msra.mxu0 0
    %658 = vmatprep.subr.bf16.mxu0 0
    %659 = vmatpush1.bf16.msra.mxu0 0
    %660 = vmatprep.mubr.bf16.mxu0 0
    %661 = vmatmul.mubr.bf16.gmra.mrb[0].mxu0 %v626
    %v662 = vpop.f32.mrb[0].mxu0
    %v663 = vadd.f32 0.0, %v662
    %v664 = vpop.f32.mrb[0].mxu0
    %v665 = vadd.f32 0.0, %v664
    %v666 = vpop.f32.mrb[0].mxu0
    %v667 = vpop.f32.mrb[0].mxu0
    %668 = vdwg.mxu0
    %v671 = vrot.slane %v663, 5
    %v672 = vrot.slane %v665, 5
    %v673 = vrot.slane %v663, 6
    %v674 = vrot.slane %v665, 6
    %v679 = vadd.f32 %v206, %v671
    %v680 = vadd.f32 %v207, %v672
    %v681 = vadd.f32 %v208, %v673
    %v682 = vadd.f32 %v209, %v674
    %v683 = vxor.u32 %v679, 2147483648
    %v684 = vxor.u32 %v680, 2147483648
    %v685 = vxor.u32 %v681, 2147483648
    %v686 = vxor.u32 %v682, 2147483648
    %v687 = vmul.f32 %v683, 1.442695
    %v688 = vpow.pop %v687
    %v689 = vmul.f32 %v684, 1.442695
    %v690 = vpow.pop %v689
    %v691 = vmul.f32 %v685, 1.442695
    %v692 = vpow.pop %v691
    %v693 = vmul.f32 %v686, 1.442695
    %v694 = vpow.pop %v693
    %v695 = vadd.f32 %v688, 1.0
    %v696 = vadd.f32 %v690, 1.0
    %v697 = vadd.f32 %v692, 1.0
    %v698 = vadd.f32 %v694, 1.0
    %v699 = vrcp.pop %v695
    %v700 = vmul.f32 1.0, %v699
    %v701 = vrcp.pop %v696
    %v702 = vmul.f32 1.0, %v701
    %v703 = vrcp.pop %v697
    %v704 = vmul.f32 1.0, %v703
    %v705 = vrcp.pop %v698
    %v706 = vmul.f32 1.0, %v705
    %v707 = vtanh.pop %v680
    %v708 = vtanh.pop %v682
    %v711 = vrot.slane %v607, 7
    %v712 = vrot.slane %v608, 7
    %v715 = vmul.f32 %v700, %v711
    %v716 = vmul.f32 %v704, %v712
    %v717 = vmul.f32 %v700, %v707
    %v718 = vmul.f32 %v704, %v708
    %721 = vrot.lane.b32.xlu0 %v717, 64
    %v722 = vpop.permute.xlu0 %721
    %723 = vrot.lane.b32.xlu0 %v718, 64
    %v724 = vpop.permute.xlu0 %723
    %v727 = vadd.f32 %v715, %v722
    %v728 = vadd.f32 %v716, %v724
    %v729 = vtanh.pop %v727
    %v730 = vtanh.pop %v728
    %v731 = vmul.f32 %v702, %v729
    %v732 = vmul.f32 %v706, %v730
    %v733 = vpack.c.bf16 %v731, %v731
    %v734 = vpack.c.bf16 %v732, %v732
    %v737 = vunpack.c.l.b16 %v733
    %v738 = vunpack.c.l.b16 %v734
    %v739 = vrot.slane %v737, 3
    %v740 = vrot.slane %v738, 2
    %v741 = vsel %vm383, %v740, %v739
    %v742 = vpack.c.b16 %v741, %v741
    %743 = vrot.lane.b32.xlu0 %v742, 64
    %v744 = vpop.permute.xlu0 %743
    %v746 = vsel %vm272, %v744, 0
    %748 = vmatprep.subr.bf16.mxu0 %v257
    %749 = vmatpush1.bf16.msra.mxu0 %v256
    %750 = vmatprep.subr.bf16.mxu0 %v259
    %751 = vmatpush1.bf16.msra.mxu0 %v258
    %752 = vmatprep.subr.bf16.mxu0 %v261
    %753 = vmatpush1.bf16.msra.mxu0 %v260
    %754 = vmatprep.subr.bf16.mxu0 %v263
    %755 = vmatpush1.bf16.msra.mxu0 %v262
    %756 = vmatprep.subr.bf16.mxu0 0
    %757 = vmatpush1.bf16.msra.mxu0 0
    %758 = vmatprep.subr.bf16.mxu0 0
    %759 = vmatpush1.bf16.msra.mxu0 0
    %760 = vmatprep.subr.bf16.mxu0 0
    %761 = vmatpush1.bf16.msra.mxu0 0
    %762 = vmatprep.subr.bf16.mxu0 0
    %763 = vmatpush1.bf16.msra.mxu0 0
    %764 = vmatprep.subr.bf16.mxu0 0
    %765 = vmatpush1.bf16.msra.mxu0 0
    %766 = vmatprep.subr.bf16.mxu0 0
    %767 = vmatpush1.bf16.msra.mxu0 0
    %768 = vmatprep.subr.bf16.mxu0 0
    %769 = vmatpush1.bf16.msra.mxu0 0
    %770 = vmatprep.subr.bf16.mxu0 0
    %771 = vmatpush1.bf16.msra.mxu0 0
    %772 = vmatprep.subr.bf16.mxu0 0
    %773 = vmatpush1.bf16.msra.mxu0 0
    %774 = vmatprep.subr.bf16.mxu0 0
    %775 = vmatpush1.bf16.msra.mxu0 0
    %776 = vmatprep.subr.bf16.mxu0 0
    %777 = vmatpush1.bf16.msra.mxu0 0
    %778 = vmatprep.subr.bf16.mxu0 0
    %779 = vmatpush1.bf16.msra.mxu0 0
    %780 = vmatprep.mubr.bf16.mxu0 0
    %781 = vmatmul.mubr.bf16.gmra.mrb[0].mxu0 %v746
    %v782 = vpop.f32.mrb[0].mxu0
    %v783 = vadd.f32 0.0, %v782
    %v784 = vpop.f32.mrb[0].mxu0
    %v785 = vadd.f32 0.0, %v784
    %v786 = vpop.f32.mrb[0].mxu0
    %v787 = vpop.f32.mrb[0].mxu0
    %788 = vdwg.mxu0
    %v791 = vrot.slane %v783, 4
    %v792 = vrot.slane %v785, 4
    %v793 = vrot.slane %v783, 5
    %v794 = vrot.slane %v785, 5
    %v799 = vadd.f32 %v206, %v791
    %v800 = vadd.f32 %v207, %v792
    %v801 = vadd.f32 %v208, %v793
    %v802 = vadd.f32 %v209, %v794
    %v803 = vxor.u32 %v799, 2147483648
    %v804 = vxor.u32 %v800, 2147483648
    %v805 = vxor.u32 %v801, 2147483648
    %v806 = vxor.u32 %v802, 2147483648
    %v807 = vmul.f32 %v803, 1.442695
    %v808 = vpow.pop %v807
    %v809 = vmul.f32 %v804, 1.442695
    %v810 = vpow.pop %v809
    %v811 = vmul.f32 %v805, 1.442695
    %v812 = vpow.pop %v811
    %v813 = vmul.f32 %v806, 1.442695
    %v814 = vpow.pop %v813
    %v815 = vadd.f32 %v808, 1.0
    %v816 = vadd.f32 %v810, 1.0
    %v817 = vadd.f32 %v812, 1.0
    %v818 = vadd.f32 %v814, 1.0
    %v819 = vrcp.pop %v815
    %v820 = vmul.f32 1.0, %v819
    %v821 = vrcp.pop %v816
    %v822 = vmul.f32 1.0, %v821
    %v823 = vrcp.pop %v817
    %v824 = vmul.f32 1.0, %v823
    %v825 = vrcp.pop %v818
    %v826 = vmul.f32 1.0, %v825
    %v827 = vtanh.pop %v800
    %v828 = vtanh.pop %v802
    %v831 = vrot.slane %v727, 7
    %v832 = vrot.slane %v728, 7
    %v835 = vmul.f32 %v820, %v831
    %v836 = vmul.f32 %v824, %v832
    %v837 = vmul.f32 %v820, %v827
    %v838 = vmul.f32 %v824, %v828
    %841 = vrot.lane.b32.xlu0 %v837, 64
    %v842 = vpop.permute.xlu0 %841
    %843 = vrot.lane.b32.xlu0 %v838, 64
    %v844 = vpop.permute.xlu0 %843
    %v847 = vadd.f32 %v835, %v842
    %v848 = vadd.f32 %v836, %v844
    %v849 = vtanh.pop %v847
    %v850 = vtanh.pop %v848
    %v851 = vmul.f32 %v822, %v849
    %v852 = vmul.f32 %v826, %v850
    %v853 = vpack.c.bf16 %v851, %v851
    %v854 = vpack.c.bf16 %v852, %v852
    %v857 = vunpack.c.l.b16 %v853
    %v858 = vunpack.c.l.b16 %v854
    %v859 = vrot.slane %v857, 4
    %v860 = vrot.slane %v858, 3
    %v861 = vsel %vm383, %v860, %v859
    %v862 = vpack.c.b16 %v861, %v861
    %863 = vrot.lane.b32.xlu0 %v862, 64
    %v864 = vpop.permute.xlu0 %863
    %v866 = vsel %vm272, %v864, 0
    %868 = vmatprep.subr.bf16.mxu0 %v257
    %869 = vmatpush1.bf16.msra.mxu0 %v256
    %870 = vmatprep.subr.bf16.mxu0 %v259
    %871 = vmatpush1.bf16.msra.mxu0 %v258
    %872 = vmatprep.subr.bf16.mxu0 %v261
    %873 = vmatpush1.bf16.msra.mxu0 %v260
    %874 = vmatprep.subr.bf16.mxu0 %v263
    %875 = vmatpush1.bf16.msra.mxu0 %v262
    %876 = vmatprep.subr.bf16.mxu0 0
    %877 = vmatpush1.bf16.msra.mxu0 0
    %878 = vmatprep.subr.bf16.mxu0 0
    %879 = vmatpush1.bf16.msra.mxu0 0
    %880 = vmatprep.subr.bf16.mxu0 0
    %881 = vmatpush1.bf16.msra.mxu0 0
    %882 = vmatprep.subr.bf16.mxu0 0
    %883 = vmatpush1.bf16.msra.mxu0 0
    %884 = vmatprep.subr.bf16.mxu0 0
    %885 = vmatpush1.bf16.msra.mxu0 0
    %886 = vmatprep.subr.bf16.mxu0 0
    %887 = vmatpush1.bf16.msra.mxu0 0
    %888 = vmatprep.subr.bf16.mxu0 0
    %889 = vmatpush1.bf16.msra.mxu0 0
    %890 = vmatprep.subr.bf16.mxu0 0
    %891 = vmatpush1.bf16.msra.mxu0 0
    %892 = vmatprep.subr.bf16.mxu0 0
    %893 = vmatpush1.bf16.msra.mxu0 0
    %894 = vmatprep.subr.bf16.mxu0 0
    %895 = vmatpush1.bf16.msra.mxu0 0
    %896 = vmatprep.subr.bf16.mxu0 0
    %897 = vmatpush1.bf16.msra.mxu0 0
    %898 = vmatprep.subr.bf16.mxu0 0
    %899 = vmatpush1.bf16.msra.mxu0 0
    %900 = vmatprep.mubr.bf16.mxu0 0
    %901 = vmatmul.mubr.bf16.gmra.mrb[0].mxu0 %v866
    %v902 = vpop.f32.mrb[0].mxu0
    %v903 = vadd.f32 0.0, %v902
    %v904 = vpop.f32.mrb[0].mxu0
    %v905 = vadd.f32 0.0, %v904
    %v906 = vpop.f32.mrb[0].mxu0
    %v907 = vpop.f32.mrb[0].mxu0
    %908 = vdwg.mxu0
    %v911 = vrot.slane %v903, 3
    %v912 = vrot.slane %v905, 3
    %v913 = vrot.slane %v903, 4
    %v914 = vrot.slane %v905, 4
    %v919 = vadd.f32 %v206, %v911
    %v920 = vadd.f32 %v207, %v912
    %v921 = vadd.f32 %v208, %v913
    %v922 = vadd.f32 %v209, %v914
    %v923 = vxor.u32 %v919, 2147483648
    %v924 = vxor.u32 %v920, 2147483648
    %v925 = vxor.u32 %v921, 2147483648
    %v926 = vxor.u32 %v922, 2147483648
    %v927 = vmul.f32 %v923, 1.442695
    %v928 = vpow.pop %v927
    %v929 = vmul.f32 %v924, 1.442695
    %v930 = vpow.pop %v929
    %v931 = vmul.f32 %v925, 1.442695
    %v932 = vpow.pop %v931
    %v933 = vmul.f32 %v926, 1.442695
    %v934 = vpow.pop %v933
    %v935 = vadd.f32 %v928, 1.0
    %v936 = vadd.f32 %v930, 1.0
    %v937 = vadd.f32 %v932, 1.0
    %v938 = vadd.f32 %v934, 1.0
    %v939 = vrcp.pop %v935
    %v940 = vmul.f32 1.0, %v939
    %v941 = vrcp.pop %v936
    %v942 = vmul.f32 1.0, %v941
    %v943 = vrcp.pop %v937
    %v944 = vmul.f32 1.0, %v943
    %v945 = vrcp.pop %v938
    %v946 = vmul.f32 1.0, %v945
    %v947 = vtanh.pop %v920
    %v948 = vtanh.pop %v922
    %v951 = vrot.slane %v847, 7
    %v952 = vrot.slane %v848, 7
    %v955 = vmul.f32 %v940, %v951
    %v956 = vmul.f32 %v944, %v952
    %v957 = vmul.f32 %v940, %v947
    %v958 = vmul.f32 %v944, %v948
    %961 = vrot.lane.b32.xlu0 %v957, 64
    %v962 = vpop.permute.xlu0 %961
    %963 = vrot.lane.b32.xlu0 %v958, 64
    %v964 = vpop.permute.xlu0 %963
    %v967 = vadd.f32 %v955, %v962
    %v968 = vadd.f32 %v956, %v964
    %v969 = vtanh.pop %v967
    %v970 = vtanh.pop %v968
    %v971 = vmul.f32 %v942, %v969
    %v972 = vmul.f32 %v946, %v970
    %v973 = vpack.c.bf16 %v971, %v971
    %v974 = vpack.c.bf16 %v972, %v972
    %v977 = vunpack.c.l.b16 %v973
    %v978 = vunpack.c.l.b16 %v974
    %v979 = vrot.slane %v977, 5
    %v980 = vrot.slane %v978, 4
    %v981 = vsel %vm383, %v980, %v979
    %v982 = vpack.c.b16 %v981, %v981
    %983 = vrot.lane.b32.xlu0 %v982, 64
    %v984 = vpop.permute.xlu0 %983
    %v986 = vsel %vm272, %v984, 0
    %988 = vmatprep.subr.bf16.mxu0 %v257
    %989 = vmatpush1.bf16.msra.mxu0 %v256
    %990 = vmatprep.subr.bf16.mxu0 %v259
    %991 = vmatpush1.bf16.msra.mxu0 %v258
    %992 = vmatprep.subr.bf16.mxu0 %v261
    %993 = vmatpush1.bf16.msra.mxu0 %v260
    %994 = vmatprep.subr.bf16.mxu0 %v263
    %995 = vmatpush1.bf16.msra.mxu0 %v262
    %996 = vmatprep.subr.bf16.mxu0 0
    %997 = vmatpush1.bf16.msra.mxu0 0
    %998 = vmatprep.subr.bf16.mxu0 0
    %999 = vmatpush1.bf16.msra.mxu0 0
    %1000 = vmatprep.subr.bf16.mxu0 0
    %1001 = vmatpush1.bf16.msra.mxu0 0
    %1002 = vmatprep.subr.bf16.mxu0 0
    %1003 = vmatpush1.bf16.msra.mxu0 0
    %1004 = vmatprep.subr.bf16.mxu0 0
    %1005 = vmatpush1.bf16.msra.mxu0 0
    %1006 = vmatprep.subr.bf16.mxu0 0
    %1007 = vmatpush1.bf16.msra.mxu0 0
    %1008 = vmatprep.subr.bf16.mxu0 0
    %1009 = vmatpush1.bf16.msra.mxu0 0
    %1010 = vmatprep.subr.bf16.mxu0 0
    %1011 = vmatpush1.bf16.msra.mxu0 0
    %1012 = vmatprep.subr.bf16.mxu0 0
    %1013 = vmatpush1.bf16.msra.mxu0 0
    %1014 = vmatprep.subr.bf16.mxu0 0
    %1015 = vmatpush1.bf16.msra.mxu0 0
    %1016 = vmatprep.subr.bf16.mxu0 0
    %1017 = vmatpush1.bf16.msra.mxu0 0
    %1018 = vmatprep.subr.bf16.mxu0 0
    %1019 = vmatpush1.bf16.msra.mxu0 0
    %1020 = vmatprep.mubr.bf16.mxu0 0
    %1021 = vmatmul.mubr.bf16.gmra.mrb[0].mxu0 %v986
    %v1022 = vpop.f32.mrb[0].mxu0
    %v1023 = vadd.f32 0.0, %v1022
    %v1024 = vpop.f32.mrb[0].mxu0
    %v1025 = vadd.f32 0.0, %v1024
    %v1026 = vpop.f32.mrb[0].mxu0
    %v1027 = vpop.f32.mrb[0].mxu0
    %1028 = vdwg.mxu0
    %v1031 = vrot.slane %v1023, 2
    %v1032 = vrot.slane %v1025, 2
    %v1033 = vrot.slane %v1023, 3
    %v1034 = vrot.slane %v1025, 3
    %v1039 = vadd.f32 %v206, %v1031
    %v1040 = vadd.f32 %v207, %v1032
    %v1041 = vadd.f32 %v208, %v1033
    %v1042 = vadd.f32 %v209, %v1034
    %v1043 = vxor.u32 %v1039, 2147483648
    %v1044 = vxor.u32 %v1040, 2147483648
    %v1045 = vxor.u32 %v1041, 2147483648
    %v1046 = vxor.u32 %v1042, 2147483648
    %v1047 = vmul.f32 %v1043, 1.442695
    %v1048 = vpow.pop %v1047
    %v1049 = vmul.f32 %v1044, 1.442695
    %v1050 = vpow.pop %v1049
    %v1051 = vmul.f32 %v1045, 1.442695
    %v1052 = vpow.pop %v1051
    %v1053 = vmul.f32 %v1046, 1.442695
    %v1054 = vpow.pop %v1053
    %v1055 = vadd.f32 %v1048, 1.0
    %v1056 = vadd.f32 %v1050, 1.0
    %v1057 = vadd.f32 %v1052, 1.0
    %v1058 = vadd.f32 %v1054, 1.0
    %v1059 = vrcp.pop %v1055
    %v1060 = vmul.f32 1.0, %v1059
    %v1061 = vrcp.pop %v1056
    %v1062 = vmul.f32 1.0, %v1061
    %v1063 = vrcp.pop %v1057
    %v1064 = vmul.f32 1.0, %v1063
    %v1065 = vrcp.pop %v1058
    %v1066 = vmul.f32 1.0, %v1065
    %v1067 = vtanh.pop %v1040
    %v1068 = vtanh.pop %v1042
    %v1071 = vrot.slane %v967, 7
    %v1072 = vrot.slane %v968, 7
    %v1075 = vmul.f32 %v1060, %v1071
    %v1076 = vmul.f32 %v1064, %v1072
    %v1077 = vmul.f32 %v1060, %v1067
    %v1078 = vmul.f32 %v1064, %v1068
    %1081 = vrot.lane.b32.xlu0 %v1077, 64
    %v1082 = vpop.permute.xlu0 %1081
    %1083 = vrot.lane.b32.xlu0 %v1078, 64
    %v1084 = vpop.permute.xlu0 %1083
    %v1087 = vadd.f32 %v1075, %v1082
    %v1088 = vadd.f32 %v1076, %v1084
    %v1089 = vtanh.pop %v1087
    %v1090 = vtanh.pop %v1088
    %v1091 = vmul.f32 %v1062, %v1089
    %v1092 = vmul.f32 %v1066, %v1090
    %v1093 = vpack.c.bf16 %v1091, %v1091
    %v1094 = vpack.c.bf16 %v1092, %v1092
    %v1097 = vunpack.c.l.b16 %v1093
    %v1098 = vunpack.c.l.b16 %v1094
    %v1099 = vrot.slane %v1097, 6
    %v1100 = vrot.slane %v1098, 5
    %v1101 = vsel %vm383, %v1100, %v1099
    %v1102 = vpack.c.b16 %v1101, %v1101
    %1103 = vrot.lane.b32.xlu0 %v1102, 64
    %v1104 = vpop.permute.xlu0 %1103
    %v1106 = vsel %vm272, %v1104, 0
    %1108 = vmatprep.subr.bf16.mxu0 %v257
    %1109 = vmatpush1.bf16.msra.mxu0 %v256
    %1110 = vmatprep.subr.bf16.mxu0 %v259
    %1111 = vmatpush1.bf16.msra.mxu0 %v258
    %1112 = vmatprep.subr.bf16.mxu0 %v261
    %1113 = vmatpush1.bf16.msra.mxu0 %v260
    %1114 = vmatprep.subr.bf16.mxu0 %v263
    %1115 = vmatpush1.bf16.msra.mxu0 %v262
    %1116 = vmatprep.subr.bf16.mxu0 0
    %1117 = vmatpush1.bf16.msra.mxu0 0
    %1118 = vmatprep.subr.bf16.mxu0 0
    %1119 = vmatpush1.bf16.msra.mxu0 0
    %1120 = vmatprep.subr.bf16.mxu0 0
    %1121 = vmatpush1.bf16.msra.mxu0 0
    %1122 = vmatprep.subr.bf16.mxu0 0
    %1123 = vmatpush1.bf16.msra.mxu0 0
    %1124 = vmatprep.subr.bf16.mxu0 0
    %1125 = vmatpush1.bf16.msra.mxu0 0
    %1126 = vmatprep.subr.bf16.mxu0 0
    %1127 = vmatpush1.bf16.msra.mxu0 0
    %1128 = vmatprep.subr.bf16.mxu0 0
    %1129 = vmatpush1.bf16.msra.mxu0 0
    %1130 = vmatprep.subr.bf16.mxu0 0
    %1131 = vmatpush1.bf16.msra.mxu0 0
    %1132 = vmatprep.subr.bf16.mxu0 0
    %1133 = vmatpush1.bf16.msra.mxu0 0
    %1134 = vmatprep.subr.bf16.mxu0 0
    %1135 = vmatpush1.bf16.msra.mxu0 0
    %1136 = vmatprep.subr.bf16.mxu0 0
    %1137 = vmatpush1.bf16.msra.mxu0 0
    %1138 = vmatprep.subr.bf16.mxu0 0
    %1139 = vmatpush1.bf16.msra.mxu0 0
    %1140 = vmatprep.mubr.bf16.mxu0 0
    %1141 = vmatmul.mubr.bf16.gmra.mrb[0].mxu0 %v1106
    %v1142 = vpop.f32.mrb[0].mxu0
    %v1143 = vadd.f32 0.0, %v1142
    %v1144 = vpop.f32.mrb[0].mxu0
    %v1145 = vadd.f32 0.0, %v1144
    %v1146 = vpop.f32.mrb[0].mxu0
    %v1147 = vpop.f32.mrb[0].mxu0
    %1148 = vdwg.mxu0
    %v1151 = vrot.slane %v1143, 1
    %v1152 = vrot.slane %v1145, 1
    %v1153 = vrot.slane %v1143, 2
    %v1154 = vrot.slane %v1145, 2
    %v1159 = vadd.f32 %v206, %v1151
    %v1160 = vadd.f32 %v207, %v1152
    %v1161 = vadd.f32 %v208, %v1153
    %v1162 = vadd.f32 %v209, %v1154
    %v1163 = vxor.u32 %v1159, 2147483648
    %v1164 = vxor.u32 %v1160, 2147483648
    %v1165 = vxor.u32 %v1161, 2147483648
    %v1166 = vxor.u32 %v1162, 2147483648
    %v1167 = vmul.f32 %v1163, 1.442695
    %v1168 = vpow.pop %v1167
    %v1169 = vmul.f32 %v1164, 1.442695
    %v1170 = vpow.pop %v1169
    %v1171 = vmul.f32 %v1165, 1.442695
    %v1172 = vpow.pop %v1171
    %v1173 = vmul.f32 %v1166, 1.442695
    %v1174 = vpow.pop %v1173
    %v1175 = vadd.f32 %v1168, 1.0
    %v1176 = vadd.f32 %v1170, 1.0
    %v1177 = vadd.f32 %v1172, 1.0
    %v1178 = vadd.f32 %v1174, 1.0
    %v1179 = vrcp.pop %v1175
    %v1180 = vmul.f32 1.0, %v1179
    %v1181 = vrcp.pop %v1176
    %v1182 = vmul.f32 1.0, %v1181
    %v1183 = vrcp.pop %v1177
    %v1184 = vmul.f32 1.0, %v1183
    %v1185 = vrcp.pop %v1178
    %v1186 = vmul.f32 1.0, %v1185
    %v1187 = vtanh.pop %v1160
    %v1188 = vtanh.pop %v1162
    %v1191 = vrot.slane %v1087, 7
    %v1192 = vrot.slane %v1088, 7
    %v1195 = vmul.f32 %v1180, %v1191
    %v1196 = vmul.f32 %v1184, %v1192
    %v1197 = vmul.f32 %v1180, %v1187
    %v1198 = vmul.f32 %v1184, %v1188
    %1201 = vrot.lane.b32.xlu0 %v1197, 64
    %v1202 = vpop.permute.xlu0 %1201
    %1203 = vrot.lane.b32.xlu0 %v1198, 64
    %v1204 = vpop.permute.xlu0 %1203
    %v1207 = vadd.f32 %v1195, %v1202
    %v1208 = vadd.f32 %v1196, %v1204
    %v1209 = vtanh.pop %v1207
    %v1210 = vtanh.pop %v1208
    %v1211 = vmul.f32 %v1182, %v1209
    %v1212 = vmul.f32 %v1186, %v1210
    %v1213 = vld [vmem:[%s8] sm:$0x3]
    %v1214 = vld [vmem:[%s9] sm:$0xff]
    %v1215 = vld [vmem:[%s10] sm:$0x1]
    %v1217 = vlaneseq
    %v1218 = vshrl.u32 %v1217, 7
    %v1219 = vsub.s32 0, %v1218
    %v1220 = vrot.slane %v1215, %v1219
    %vm1222 = vcmask 64512
    %v1224 = vsel %vm1222, %v1213, 0
    %1226 = vmatprep.subr.mxu0 0.0
    %1227 = vmatpush1.msra.mxu0 %v1214
    %1228 = vmatprep.subr.mxu0 0.0
    %1229 = vmatpush1.msra.mxu0 0.0
    %1230 = vmatprep.subr.mxu0 0.0
    %1231 = vmatpush1.msra.mxu0 0.0
    %1232 = vmatprep.subr.mxu0 0.0
    %1233 = vmatpush1.msra.mxu0 0.0
    %1234 = vmatprep.subr.mxu0 0.0
    %1235 = vmatpush1.msra.mxu0 0.0
    %1236 = vmatprep.subr.mxu0 0.0
    %1237 = vmatpush1.msra.mxu0 0.0
    %1238 = vmatprep.subr.mxu0 0.0
    %1239 = vmatpush1.msra.mxu0 0.0
    %1240 = vmatprep.subr.mxu0 0.0
    %1241 = vmatpush1.msra.mxu0 0.0
    %1242 = vmatprep.subr.mxu0 0.0
    %1243 = vmatpush1.msra.mxu0 0.0
    %1244 = vmatprep.subr.mxu0 0.0
    %1245 = vmatpush1.msra.mxu0 0.0
    %1246 = vmatprep.subr.mxu0 0.0
    %1247 = vmatpush1.msra.mxu0 0.0
    %1248 = vmatprep.subr.mxu0 0.0
    %1249 = vmatpush1.msra.mxu0 0.0
    %1250 = vmatprep.subr.mxu0 0.0
    %1251 = vmatpush1.msra.mxu0 0.0
    %1252 = vmatprep.subr.mxu0 0.0
    %1253 = vmatpush1.msra.mxu0 0.0
    %1254 = vmatprep.subr.mxu0 0.0
    %1255 = vmatpush1.msra.mxu0 0.0
    %1256 = vmatprep.subr.mxu0 0.0
    %1257 = vmatpush1.msra.mxu0 0.0
    %1258 = vmatprep.subr.mxu0 0.0
    %1259 = vmatpush1.msra.mxu0 0.0
    %1260 = vmatprep.subr.mxu0 0.0
    %1261 = vmatpush1.msra.mxu0 0.0
    %1262 = vmatprep.subr.mxu0 0.0
    %1263 = vmatpush1.msra.mxu0 0.0
    %1264 = vmatprep.subr.mxu0 0.0
    %1265 = vmatpush1.msra.mxu0 0.0
    %1266 = vmatprep.subr.mxu0 0.0
    %1267 = vmatpush1.msra.mxu0 0.0
    %1268 = vmatprep.subr.mxu0 0.0
    %1269 = vmatpush1.msra.mxu0 0.0
    %1270 = vmatprep.subr.mxu0 0.0
    %1271 = vmatpush1.msra.mxu0 0.0
    %1272 = vmatprep.subr.mxu0 0.0
    %1273 = vmatpush1.msra.mxu0 0.0
    %1274 = vmatprep.subr.mxu0 0.0
    %1275 = vmatpush1.msra.mxu0 0.0
    %1276 = vmatprep.subr.mxu0 0.0
    %1277 = vmatpush1.msra.mxu0 0.0
    %1278 = vmatprep.subr.mxu0 0.0
    %1279 = vmatpush1.msra.mxu0 0.0
    %1280 = vmatprep.subr.mxu0 0.0
    %1281 = vmatpush1.msra.mxu0 0.0
    %1282 = vmatprep.subr.mxu0 0.0
    %1283 = vmatpush1.msra.mxu0 0.0
    %1284 = vmatprep.subr.mxu0 0.0
    %1285 = vmatpush1.msra.mxu0 0.0
    %1286 = vmatprep.subr.mxu0 0.0
    %1287 = vmatpush1.msra.mxu0 0.0
    %1288 = vmatprep.subr.mxu0 0.0
    %1289 = vmatpush1.msra.mxu0 0.0
    %1290 = vmatprep.mubr.f32.mxu0 0.0
    %1291 = vmatmul.mubr.f32.gmra.mrb[0].mxu0 %v1224
    %v1292 = vpop.f32.mrb[0].mxu0
    %v1293 = vadd.f32 %v1220, %v1292
    %v1294 = vpop.f32.mrb[0].mxu0
    %1295 = vdwg.mxu0
    %vm1296 = vcmp.gt.f32.partialorder %v1293, 0.0
    %v1297 = vmin.f32 %v1293, 0.0
    %v1298 = vmul.f32 %v1297, 1.442695
    %v1299 = vpow.pop %v1298
    %v1300 = vsub.f32 %v1299, 1.0
    %v1301 = vsel %vm1296, %v1293, %v1300
    %v1302 = vld [vmem:[%s11] sm:$0xff]
    %v1303 = vld [vmem:[%s11 + $0x8] sm:$0xff]
    %v1304 = vld [vmem:[%s11 + $0x10] sm:$0xff]
    %v1305 = vld [vmem:[%s11 + $0x18] sm:$0xff]
    %v1306 = vld [vmem:[%s12] sm:$0x1]
    %v1308 = vlaneseq
    %v1309 = vshrl.u32 %v1308, 7
    %v1310 = vsub.s32 0, %v1309
    %v1311 = vrot.slane %v1306, %v1310
    %vm1313 = vcmask 261120
    %v1315 = vsel %vm1313, %v1301, 0
    %1317 = vmatprep.subr.mxu0 0.0
    %1318 = vmatpush1.msra.mxu0 %v1302
    %1319 = vmatprep.subr.mxu0 0.0
    %1320 = vmatpush1.msra.mxu0 %v1303
    %1321 = vmatprep.subr.mxu0 0.0
    %1322 = vmatpush1.msra.mxu0 %v1304
    %1323 = vmatprep.subr.mxu0 0.0
    %1324 = vmatpush1.msra.mxu0 %v1305
    %1325 = vmatprep.subr.mxu0 0.0
    %1326 = vmatpush1.msra.mxu0 0.0
    %1327 = vmatprep.subr.mxu0 0.0
    %1328 = vmatpush1.msra.mxu0 0.0
    %1329 = vmatprep.subr.mxu0 0.0
    %1330 = vmatpush1.msra.mxu0 0.0
    %1331 = vmatprep.subr.mxu0 0.0
    %1332 = vmatpush1.msra.mxu0 0.0
    %1333 = vmatprep.subr.mxu0 0.0
    %1334 = vmatpush1.msra.mxu0 0.0
    %1335 = vmatprep.subr.mxu0 0.0
    %1336 = vmatpush1.msra.mxu0 0.0
    %1337 = vmatprep.subr.mxu0 0.0
    %1338 = vmatpush1.msra.mxu0 0.0
    %1339 = vmatprep.subr.mxu0 0.0
    %1340 = vmatpush1.msra.mxu0 0.0
    %1341 = vmatprep.subr.mxu0 0.0
    %1342 = vmatpush1.msra.mxu0 0.0
    %1343 = vmatprep.subr.mxu0 0.0
    %1344 = vmatpush1.msra.mxu0 0.0
    %1345 = vmatprep.subr.mxu0 0.0
    %1346 = vmatpush1.msra.mxu0 0.0
    %1347 = vmatprep.subr.mxu0 0.0
    %1348 = vmatpush1.msra.mxu0 0.0
    %1349 = vmatprep.subr.mxu0 0.0
    %1350 = vmatpush1.msra.mxu0 0.0
    %1351 = vmatprep.subr.mxu0 0.0
    %1352 = vmatpush1.msra.mxu0 0.0
    %1353 = vmatprep.subr.mxu0 0.0
    %1354 = vmatpush1.msra.mxu0 0.0
    %1355 = vmatprep.subr.mxu0 0.0
    %1356 = vmatpush1.msra.mxu0 0.0
    %1357 = vmatprep.subr.mxu0 0.0
    %1358 = vmatpush1.msra.mxu0 0.0
    %1359 = vmatprep.subr.mxu0 0.0
    %1360 = vmatpush1.msra.mxu0 0.0
    %1361 = vmatprep.subr.mxu0 0.0
    %1362 = vmatpush1.msra.mxu0 0.0
    %1363 = vmatprep.subr.mxu0 0.0
    %1364 = vmatpush1.msra.mxu0 0.0
    %1365 = vmatprep.subr.mxu0 0.0
    %1366 = vmatpush1.msra.mxu0 0.0
    %1367 = vmatprep.subr.mxu0 0.0
    %1368 = vmatpush1.msra.mxu0 0.0
    %1369 = vmatprep.subr.mxu0 0.0
    %1370 = vmatpush1.msra.mxu0 0.0
    %1371 = vmatprep.subr.mxu0 0.0
    %1372 = vmatpush1.msra.mxu0 0.0
    %1373 = vmatprep.subr.mxu0 0.0
    %1374 = vmatpush1.msra.mxu0 0.0
    %1375 = vmatprep.subr.mxu0 0.0
    %1376 = vmatpush1.msra.mxu0 0.0
    %1377 = vmatprep.subr.mxu0 0.0
    %1378 = vmatpush1.msra.mxu0 0.0
    %1379 = vmatprep.subr.mxu0 0.0
    %1380 = vmatpush1.msra.mxu0 0.0
    %1381 = vmatprep.mubr.f32.mxu0 0.0
    %1382 = vmatmul.mubr.f32.gmra.mrb[0].mxu0 %v1315
    %v1383 = vpop.f32.mrb[0].mxu0
    %v1384 = vadd.f32 %v1311, %v1383
    %v1385 = vpop.f32.mrb[0].mxu0
    %1386 = vdwg.mxu0
    %vm1387 = vcmp.gt.f32.partialorder %v1384, 0.0
    %v1388 = vmin.f32 %v1384, 0.0
    %v1389 = vmul.f32 %v1388, 1.442695
    %v1390 = vpow.pop %v1389
    %v1391 = vsub.f32 %v1390, 1.0
    %v1392 = vsel %vm1387, %v1384, %v1391
    %v1393 = vld [vmem:[%s14] sm:$0x1]
    %v1394 = vld [vmem:[%s13] sm:$0xff]
    %v1395 = vld [vmem:[%s13 + $0x8] sm:$0xff]
    %v1396 = vld [vmem:[%s13 + $0x10] sm:$0xff]
    %v1397 = vld [vmem:[%s13 + $0x18] sm:$0xff]
    %v1398 = vld [vmem:[%s13 + $0x20] sm:$0xff]
    %v1399 = vld [vmem:[%s13 + $0x28] sm:$0xff]
    %v1400 = vld [vmem:[%s13 + $0x30] sm:$0xff]
    %v1401 = vld [vmem:[%s13 + $0x38] sm:$0xff]
    %v1404 = vrot.slane %v1211, 7
    %v1405 = vrot.slane %v1212, 6
    %v1406 = vsel %vm383, %v1405, %v1404
    %1407 = vrot.lane.b32.xlu0 %v1406, 64
    %v1408 = vpop.permute.xlu0 %1407
    %v1409 = vsel %vm272, %v1408, 0
    %1411 = vmatprep.subr.mxu0 0.0
    %1412 = vmatpush1.msra.mxu0 %v1394
    %1413 = vmatprep.subr.mxu0 0.0
    %1414 = vmatpush1.msra.mxu0 %v1395
    %1415 = vmatprep.subr.mxu0 0.0
    %1416 = vmatpush1.msra.mxu0 %v1396
    %1417 = vmatprep.subr.mxu0 0.0
    %1418 = vmatpush1.msra.mxu0 %v1397
    %1419 = vmatprep.subr.mxu0 0.0
    %1420 = vmatpush1.msra.mxu0 %v1398
    %1421 = vmatprep.subr.mxu0 0.0
    %1422 = vmatpush1.msra.mxu0 %v1399
    %1423 = vmatprep.subr.mxu0 0.0
    %1424 = vmatpush1.msra.mxu0 %v1400
    %1425 = vmatprep.subr.mxu0 0.0
    %1426 = vmatpush1.msra.mxu0 %v1401
    %1427 = vmatprep.subr.mxu0 0.0
    %1428 = vmatpush1.msra.mxu0 0.0
    %1429 = vmatprep.subr.mxu0 0.0
    %1430 = vmatpush1.msra.mxu0 0.0
    %1431 = vmatprep.subr.mxu0 0.0
    %1432 = vmatpush1.msra.mxu0 0.0
    %1433 = vmatprep.subr.mxu0 0.0
    %1434 = vmatpush1.msra.mxu0 0.0
    %1435 = vmatprep.subr.mxu0 0.0
    %1436 = vmatpush1.msra.mxu0 0.0
    %1437 = vmatprep.subr.mxu0 0.0
    %1438 = vmatpush1.msra.mxu0 0.0
    %1439 = vmatprep.subr.mxu0 0.0
    %1440 = vmatpush1.msra.mxu0 0.0
    %1441 = vmatprep.subr.mxu0 0.0
    %1442 = vmatpush1.msra.mxu0 0.0
    %1443 = vmatprep.subr.mxu0 0.0
    %1444 = vmatpush1.msra.mxu0 0.0
    %1445 = vmatprep.subr.mxu0 0.0
    %1446 = vmatpush1.msra.mxu0 0.0
    %1447 = vmatprep.subr.mxu0 0.0
    %1448 = vmatpush1.msra.mxu0 0.0
    %1449 = vmatprep.subr.mxu0 0.0
    %1450 = vmatpush1.msra.mxu0 0.0
    %1451 = vmatprep.subr.mxu0 0.0
    %1452 = vmatpush1.msra.mxu0 0.0
    %1453 = vmatprep.subr.mxu0 0.0
    %1454 = vmatpush1.msra.mxu0 0.0
    %1455 = vmatprep.subr.mxu0 0.0
    %1456 = vmatpush1.msra.mxu0 0.0
    %1457 = vmatprep.subr.mxu0 0.0
    %1458 = vmatpush1.msra.mxu0 0.0
    %1459 = vmatprep.subr.mxu0 0.0
    %1460 = vmatpush1.msra.mxu0 0.0
    %1461 = vmatprep.subr.mxu0 0.0
    %1462 = vmatpush1.msra.mxu0 0.0
    %1463 = vmatprep.subr.mxu0 0.0
    %1464 = vmatpush1.msra.mxu0 0.0
    %1465 = vmatprep.subr.mxu0 0.0
    %1466 = vmatpush1.msra.mxu0 0.0
    %1467 = vmatprep.subr.mxu0 0.0
    %1468 = vmatpush1.msra.mxu0 0.0
    %1469 = vmatprep.subr.mxu0 0.0
    %1470 = vmatpush1.msra.mxu0 0.0
    %1471 = vmatprep.subr.mxu0 0.0
    %1472 = vmatpush1.msra.mxu0 0.0
    %1473 = vmatprep.subr.mxu0 0.0
    %1474 = vmatpush1.msra.mxu0 0.0
    %1475 = vmatprep.mubr.f32.mxu0 0.0
    %1476 = vmatmul.mubr.f32.gmra.mrb[0].mxu0 %v1409
    %v1477 = vpop.f32.mrb[0].mxu0
    %v1478 = vadd.f32 0.0, %v1477
    %v1479 = vpop.f32.mrb[0].mxu0
    %1480 = vdwg.mxu0
    %v1482 = vlaneseq
    %v1483 = vshrl.u32 %v1482, 7
    %v1484 = vsub.s32 0, %v1483
    %v1485 = vrot.slane %v1393, %v1484
    %v1487 = vadd.f32 %v1485, %v1478
    %v1488 = vld [vmem:[%s13 + $0x40] sm:$0xff]
    %v1489 = vld [vmem:[%s13 + $0x48] sm:$0xff]
    %v1490 = vld [vmem:[%s13 + $0x50] sm:$0xff]
    %v1491 = vld [vmem:[%s13 + $0x58] sm:$0xff]
    %v1493 = vsel %vm1313, %v1392, 0
    %1495 = vmatprep.subr.mxu0 0.0
    %1496 = vmatpush1.msra.mxu0 %v1488
    %1497 = vmatprep.subr.mxu0 0.0
    %1498 = vmatpush1.msra.mxu0 %v1489
    %1499 = vmatprep.subr.mxu0 0.0
    %1500 = vmatpush1.msra.mxu0 %v1490
    %1501 = vmatprep.subr.mxu0 0.0
    %1502 = vmatpush1.msra.mxu0 %v1491
    %1503 = vmatprep.subr.mxu0 0.0
    %1504 = vmatpush1.msra.mxu0 0.0
    %1505 = vmatprep.subr.mxu0 0.0
    %1506 = vmatpush1.msra.mxu0 0.0
    %1507 = vmatprep.subr.mxu0 0.0
    %1508 = vmatpush1.msra.mxu0 0.0
    %1509 = vmatprep.subr.mxu0 0.0
    %1510 = vmatpush1.msra.mxu0 0.0
    %1511 = vmatprep.subr.mxu0 0.0
    %1512 = vmatpush1.msra.mxu0 0.0
    %1513 = vmatprep.subr.mxu0 0.0
    %1514 = vmatpush1.msra.mxu0 0.0
    %1515 = vmatprep.subr.mxu0 0.0
    %1516 = vmatpush1.msra.mxu0 0.0
    %1517 = vmatprep.subr.mxu0 0.0
    %1518 = vmatpush1.msra.mxu0 0.0
    %1519 = vmatprep.subr.mxu0 0.0
    %1520 = vmatpush1.msra.mxu0 0.0
    %1521 = vmatprep.subr.mxu0 0.0
    %1522 = vmatpush1.msra.mxu0 0.0
    %1523 = vmatprep.subr.mxu0 0.0
    %1524 = vmatpush1.msra.mxu0 0.0
    %1525 = vmatprep.subr.mxu0 0.0
    %1526 = vmatpush1.msra.mxu0 0.0
    %1527 = vmatprep.subr.mxu0 0.0
    %1528 = vmatpush1.msra.mxu0 0.0
    %1529 = vmatprep.subr.mxu0 0.0
    %1530 = vmatpush1.msra.mxu0 0.0
    %1531 = vmatprep.subr.mxu0 0.0
    %1532 = vmatpush1.msra.mxu0 0.0
    %1533 = vmatprep.subr.mxu0 0.0
    %1534 = vmatpush1.msra.mxu0 0.0
    %1535 = vmatprep.subr.mxu0 0.0
    %1536 = vmatpush1.msra.mxu0 0.0
    %1537 = vmatprep.subr.mxu0 0.0
    %1538 = vmatpush1.msra.mxu0 0.0
    %1539 = vmatprep.subr.mxu0 0.0
    %1540 = vmatpush1.msra.mxu0 0.0
    %1541 = vmatprep.subr.mxu0 0.0
    %1542 = vmatpush1.msra.mxu0 0.0
    %1543 = vmatprep.subr.mxu0 0.0
    %1544 = vmatpush1.msra.mxu0 0.0
    %1545 = vmatprep.subr.mxu0 0.0
    %1546 = vmatpush1.msra.mxu0 0.0
    %1547 = vmatprep.subr.mxu0 0.0
    %1548 = vmatpush1.msra.mxu0 0.0
    %1549 = vmatprep.subr.mxu0 0.0
    %1550 = vmatpush1.msra.mxu0 0.0
    %1551 = vmatprep.subr.mxu0 0.0
    %1552 = vmatpush1.msra.mxu0 0.0
    %1553 = vmatprep.subr.mxu0 0.0
    %1554 = vmatpush1.msra.mxu0 0.0
    %1555 = vmatprep.subr.mxu0 0.0
    %1556 = vmatpush1.msra.mxu0 0.0
    %1557 = vmatprep.subr.mxu0 0.0
    %1558 = vmatpush1.msra.mxu0 0.0
    %1559 = vmatprep.mubr.f32.mxu0 0.0
    %1560 = vmatmul.mubr.f32.gmra.mrb[0].mxu0 %v1493
    %v1561 = vpop.f32.mrb[0].mxu0
    %v1562 = vadd.f32 0.0, %v1561
    %v1563 = vpop.f32.mrb[0].mxu0
    %1564 = vdwg.mxu0
    %v1565 = vadd.f32 %v1487, %v1562
    %vm1566 = vcmp.gt.f32.partialorder %v1565, 0.0
    %v1567 = vmin.f32 %v1565, 0.0
    %v1568 = vmul.f32 %v1567, 1.442695
    %v1569 = vpow.pop %v1568
    %v1570 = vsub.f32 %v1569, 1.0
    %v1571 = vsel %vm1566, %v1565, %v1570
    %v1572 = vld [vmem:[%s15] sm:$0xff]
    %v1573 = vld [vmem:[%s15 + $0x8] sm:$0xff]
    %v1574 = vld [vmem:[%s15 + $0x10] sm:$0xff]
    %v1575 = vld [vmem:[%s15 + $0x18] sm:$0xff]
    %v1576 = vld [vmem:[%s16] sm:$0x1]
    %v1578 = vlaneseq
    %v1579 = vshrl.u32 %v1578, 7
    %v1580 = vsub.s32 0, %v1579
    %v1581 = vrot.slane %v1576, %v1580
    %v1584 = vsel %vm1313, %v1571, 0
    %1586 = vmatprep.subr.mxu0 0.0
    %1587 = vmatpush1.msra.mxu0 %v1572
    %1588 = vmatprep.subr.mxu0 0.0
    %1589 = vmatpush1.msra.mxu0 %v1573
    %1590 = vmatprep.subr.mxu0 0.0
    %1591 = vmatpush1.msra.mxu0 %v1574
    %1592 = vmatprep.subr.mxu0 0.0
    %1593 = vmatpush1.msra.mxu0 %v1575
    %1594 = vmatprep.subr.mxu0 0.0
    %1595 = vmatpush1.msra.mxu0 0.0
    %1596 = vmatprep.subr.mxu0 0.0
    %1597 = vmatpush1.msra.mxu0 0.0
    %1598 = vmatprep.subr.mxu0 0.0
    %1599 = vmatpush1.msra.mxu0 0.0
    %1600 = vmatprep.subr.mxu0 0.0
    %1601 = vmatpush1.msra.mxu0 0.0
    %1602 = vmatprep.subr.mxu0 0.0
    %1603 = vmatpush1.msra.mxu0 0.0
    %1604 = vmatprep.subr.mxu0 0.0
    %1605 = vmatpush1.msra.mxu0 0.0
    %1606 = vmatprep.subr.mxu0 0.0
    %1607 = vmatpush1.msra.mxu0 0.0
    %1608 = vmatprep.subr.mxu0 0.0
    %1609 = vmatpush1.msra.mxu0 0.0
    %1610 = vmatprep.subr.mxu0 0.0
    %1611 = vmatpush1.msra.mxu0 0.0
    %1612 = vmatprep.subr.mxu0 0.0
    %1613 = vmatpush1.msra.mxu0 0.0
    %1614 = vmatprep.subr.mxu0 0.0
    %1615 = vmatpush1.msra.mxu0 0.0
    %1616 = vmatprep.subr.mxu0 0.0
    %1617 = vmatpush1.msra.mxu0 0.0
    %1618 = vmatprep.subr.mxu0 0.0
    %1619 = vmatpush1.msra.mxu0 0.0
    %1620 = vmatprep.subr.mxu0 0.0
    %1621 = vmatpush1.msra.mxu0 0.0
    %1622 = vmatprep.subr.mxu0 0.0
    %1623 = vmatpush1.msra.mxu0 0.0
    %1624 = vmatprep.subr.mxu0 0.0
    %1625 = vmatpush1.msra.mxu0 0.0
    %1626 = vmatprep.subr.mxu0 0.0
    %1627 = vmatpush1.msra.mxu0 0.0
    %1628 = vmatprep.subr.mxu0 0.0
    %1629 = vmatpush1.msra.mxu0 0.0
    %1630 = vmatprep.subr.mxu0 0.0
    %1631 = vmatpush1.msra.mxu0 0.0
    %1632 = vmatprep.subr.mxu0 0.0
    %1633 = vmatpush1.msra.mxu0 0.0
    %1634 = vmatprep.subr.mxu0 0.0
    %1635 = vmatpush1.msra.mxu0 0.0
    %1636 = vmatprep.subr.mxu0 0.0
    %1637 = vmatpush1.msra.mxu0 0.0
    %1638 = vmatprep.subr.mxu0 0.0
    %1639 = vmatpush1.msra.mxu0 0.0
    %1640 = vmatprep.subr.mxu0 0.0
    %1641 = vmatpush1.msra.mxu0 0.0
    %1642 = vmatprep.subr.mxu0 0.0
    %1643 = vmatpush1.msra.mxu0 0.0
    %1644 = vmatprep.subr.mxu0 0.0
    %1645 = vmatpush1.msra.mxu0 0.0
    %1646 = vmatprep.subr.mxu0 0.0
    %1647 = vmatpush1.msra.mxu0 0.0
    %1648 = vmatprep.subr.mxu0 0.0
    %1649 = vmatpush1.msra.mxu0 0.0
    %1650 = vmatprep.mubr.f32.mxu0 0.0
    %1651 = vmatmul.mubr.f32.gmra.mrb[0].mxu0 %v1584
    %v1652 = vpop.f32.mrb[0].mxu0
    %v1653 = vadd.f32 %v1581, %v1652
    %v1654 = vpop.f32.mrb[0].mxu0
    %1655 = vdwg.mxu0
    %vm1656 = vcmp.gt.f32.partialorder %v1653, 0.0
    %v1657 = vmin.f32 %v1653, 0.0
    %v1658 = vmul.f32 %v1657, 1.442695
    %v1659 = vpow.pop %v1658
    %v1660 = vsub.f32 %v1659, 1.0
    %v1661 = vsel %vm1656, %v1653, %v1660
    %v1662 = vld [vmem:[%s17] sm:$0xff]
    %v1663 = vld [vmem:[%s17 + $0x8] sm:$0xff]
    %v1664 = vld [vmem:[%s17 + $0x10] sm:$0xff]
    %v1665 = vld [vmem:[%s17 + $0x18] sm:$0xff]
    %v1666 = vld [vmem:[%s18] sm:$0x1]
    %v1668 = vlaneseq
    %v1669 = vshrl.u32 %v1668, 7
    %v1670 = vsub.s32 0, %v1669
    %v1671 = vrot.slane %v1666, %v1670
    %v1674 = vsel %vm1313, %v1661, 0
    %1676 = vmatprep.subr.mxu0 0.0
    %1677 = vmatpush1.msra.mxu0 %v1662
    %1678 = vmatprep.subr.mxu0 0.0
    %1679 = vmatpush1.msra.mxu0 %v1663
    %1680 = vmatprep.subr.mxu0 0.0
    %1681 = vmatpush1.msra.mxu0 %v1664
    %1682 = vmatprep.subr.mxu0 0.0
    %1683 = vmatpush1.msra.mxu0 %v1665
    %1684 = vmatprep.subr.mxu0 0.0
    %1685 = vmatpush1.msra.mxu0 0.0
    %1686 = vmatprep.subr.mxu0 0.0
    %1687 = vmatpush1.msra.mxu0 0.0
    %1688 = vmatprep.subr.mxu0 0.0
    %1689 = vmatpush1.msra.mxu0 0.0
    %1690 = vmatprep.subr.mxu0 0.0
    %1691 = vmatpush1.msra.mxu0 0.0
    %1692 = vmatprep.subr.mxu0 0.0
    %1693 = vmatpush1.msra.mxu0 0.0
    %1694 = vmatprep.subr.mxu0 0.0
    %1695 = vmatpush1.msra.mxu0 0.0
    %1696 = vmatprep.subr.mxu0 0.0
    %1697 = vmatpush1.msra.mxu0 0.0
    %1698 = vmatprep.subr.mxu0 0.0
    %1699 = vmatpush1.msra.mxu0 0.0
    %1700 = vmatprep.subr.mxu0 0.0
    %1701 = vmatpush1.msra.mxu0 0.0
    %1702 = vmatprep.subr.mxu0 0.0
    %1703 = vmatpush1.msra.mxu0 0.0
    %1704 = vmatprep.subr.mxu0 0.0
    %1705 = vmatpush1.msra.mxu0 0.0
    %1706 = vmatprep.subr.mxu0 0.0
    %1707 = vmatpush1.msra.mxu0 0.0
    %1708 = vmatprep.subr.mxu0 0.0
    %1709 = vmatpush1.msra.mxu0 0.0
    %1710 = vmatprep.subr.mxu0 0.0
    %1711 = vmatpush1.msra.mxu0 0.0
    %1712 = vmatprep.subr.mxu0 0.0
    %1713 = vmatpush1.msra.mxu0 0.0
    %1714 = vmatprep.subr.mxu0 0.0
    %1715 = vmatpush1.msra.mxu0 0.0
    %1716 = vmatprep.subr.mxu0 0.0
    %1717 = vmatpush1.msra.mxu0 0.0
    %1718 = vmatprep.subr.mxu0 0.0
    %1719 = vmatpush1.msra.mxu0 0.0
    %1720 = vmatprep.subr.mxu0 0.0
    %1721 = vmatpush1.msra.mxu0 0.0
    %1722 = vmatprep.subr.mxu0 0.0
    %1723 = vmatpush1.msra.mxu0 0.0
    %1724 = vmatprep.subr.mxu0 0.0
    %1725 = vmatpush1.msra.mxu0 0.0
    %1726 = vmatprep.subr.mxu0 0.0
    %1727 = vmatpush1.msra.mxu0 0.0
    %1728 = vmatprep.subr.mxu0 0.0
    %1729 = vmatpush1.msra.mxu0 0.0
    %1730 = vmatprep.subr.mxu0 0.0
    %1731 = vmatpush1.msra.mxu0 0.0
    %1732 = vmatprep.subr.mxu0 0.0
    %1733 = vmatpush1.msra.mxu0 0.0
    %1734 = vmatprep.subr.mxu0 0.0
    %1735 = vmatpush1.msra.mxu0 0.0
    %1736 = vmatprep.subr.mxu0 0.0
    %1737 = vmatpush1.msra.mxu0 0.0
    %1738 = vmatprep.subr.mxu0 0.0
    %1739 = vmatpush1.msra.mxu0 0.0
    %1740 = vmatprep.mubr.f32.mxu0 0.0
    %1741 = vmatmul.mubr.f32.gmra.mrb[0].mxu0 %v1674
    %v1742 = vpop.f32.mrb[0].mxu0
    %v1743 = vadd.f32 %v1671, %v1742
    %v1744 = vpop.f32.mrb[0].mxu0
    %1745 = vdwg.mxu0
    %vm1746 = vcmask 58368
    %1747 = vst.msk [vmem:[#allocation2] sm:$0x3] %vm1746, %v1743
    // Predicated region
    $region78: #{tpu_custom_call.1} parent=1 // pred_check
      _
    $region79: #{tpu_custom_call.1} parent=1 // pred_check_branch
      %1749 = sbr.rel (0) target = $region81
    $region80: #{tpu_custom_call.1} parent=1 // pred_region
      %s1751 = ssub.s32 32, 32
      %1752 = vsyncadd [#allocation3], %s1751
      %s1754 = sshll.u32 [#allocation2], 4
      %s1755 = int_to_ptr.vmem [resolvable:$true] %s1754
      %1757 = dma.vmem_to_hbm [thread:$0]  %s1755, 32, %s19, [#allocation3]
    $region81: #{tpu_custom_call.1} parent=1 // pred_fallthru
      _
    // Predicated region
    $region82: #{tpu_custom_call.1} parent=1 // pred_check
      _
    $region83: #{tpu_custom_call.1} parent=1 // pred_check_branch
      %1759 = sbr.rel (0) target = $region85
    $region84: #{tpu_custom_call.1} parent=1 // pred_region
      %1760 = dma.done [#allocation3], 32
    $region85: #{tpu_custom_call.1} parent=1 // pred_fallthru
      _
    %1761 = vsyncpa [#allocation3], 1

</llo_original>
